<compile_context>
chip_gen: v6e
topology: v6e:2x2x1
jax: 0.10.0
libtpu: 0.0.40
codegen_flags: <defaults>
</compile_context>

<pallas_src>
import math
import functools

import jax
import jax.numpy as jnp
from jax.experimental import pallas as pl
from jax.experimental.pallas import tpu as pltpu

F32 = jnp.float32


# ------------------------------- Pallas kernel -------------------------------

def _spatial_attention_kernel(w_ref, x_ref, o_ref, *, C, H, W, K):
    """Fused: channel mean/max -> 7x7 (2->1) conv -> sigmoid, one batch element.

    w_ref : (2*K*K,) f32 conv weights in SMEM, layout [c_in, kh, kw] row-major
    x_ref : (1, C, H+2P, W+2P) zero-padded input block in VMEM
    o_ref : (1, H, W) output block
    """
    xp = x_ref[0]                                   # (C, Hp, Wp)

    # Channel reduction over the leading (untiled) axis: cheap VPU elementwise.
    avg = jnp.sum(xp, axis=0) * (1.0 / C)           # (Hp, Wp)
    mx = jnp.max(xp, axis=0)                        # (Hp, Wp)

    # Direct 7x7 stencil over the two reduced maps; weights are SMEM scalars.
    acc = jnp.zeros((H, W), jnp.float32)
    for di in range(K):
        for dj in range(K):
            a_win = avg[di:di + H, dj:dj + W]
            m_win = mx[di:di + H, dj:dj + W]
            acc = acc + a_win * w_ref[0 * K * K + di * K + dj]
            acc = acc + m_win * w_ref[1 * K * K + di * K + dj]

    # Sigmoid (exp on the EUP, reciprocal/add on the VPU), single slab store.
    o_ref[0] = 1.0 / (1.0 + jnp.exp(-acc))


# --------------------------------- wrapper -----------------------------------

def spatial_attention_forward(x_nchw, conv_w, kernel_size=7):
    """x_nchw: (B, C, H, W) f32; conv_w: (1, 2, k, k) PyTorch Conv2d weight."""
    assert kernel_size in (3, 7), "kernel size must be 3 or 7"
    pad = 3 if kernel_size == 7 else 1
    B, C, H, W = x_nchw.shape
    Hp, Wp = H + 2 * pad, W + 2 * pad

    # Zero-pad spatially in glue; equivalent to the conv's zero padding of the
    # concatenated (avg, max) map since mean(0)=max(0)=0 at padded positions.
    xp = jnp.pad(x_nchw.astype(F32), ((0, 0), (0, 0), (pad, pad), (pad, pad)))
    w_flat = conv_w.astype(F32).reshape(-1)         # (2*k*k,) [c_in, kh, kw]

    out = pl.pallas_call(
        functools.partial(_spatial_attention_kernel, C=C, H=H, W=W, K=kernel_size),
        out_shape=jax.ShapeDtypeStruct((B, H, W), F32),
        grid=(B,),
        in_specs=[
            pl.BlockSpec(memory_space=pltpu.MemorySpace.SMEM),       # weights
            pl.BlockSpec((1, C, Hp, Wp), lambda b: (b, 0, 0, 0)),    # padded input
        ],
        out_specs=pl.BlockSpec((1, H, W), lambda b: (b, 0, 0)),
        compiler_params=pltpu.CompilerParams(
            dimension_semantics=("parallel",)),
    )(w_flat, xp)
    # TODO(synk): for very large H, tile rows with a 3-row halo (pl.Element
    # offsets) instead of one whole-image block per program.
    return out.reshape(B, 1, H, W)


# ----------------------------- pure-JAX reference ----------------------------

def spatial_attention_reference(x, w, kernel_size=7):
    pad = 3 if kernel_size == 7 else 1
    B, _, H, W = x.shape
    avg = jnp.mean(x, axis=1, keepdims=True)
    mx = jnp.max(x, axis=1, keepdims=True)
    xc = jnp.concatenate([avg, mx], axis=1)                         # (B, 2, H, W)
    xcp = jnp.pad(xc, ((0, 0), (0, 0), (pad, pad), (pad, pad)))
    out = jnp.zeros((B, H, W), F32)
    for di in range(kernel_size):
        for dj in range(kernel_size):
            out = out + xcp[:, 0, di:di + H, dj:dj + W] * w[0, 0, di, dj]
            out = out + xcp[:, 1, di:di + H, dj:dj + W] * w[0, 1, di, dj]
    return jax.nn.sigmoid(out)[:, None]


# ------------------------------------ main ------------------------------------

if __name__ == "__main__":
    key = jax.random.PRNGKey(0)
    k_x, k_w = jax.random.split(key)

    B, C, H, W = 2, 4, 16, 16
    KSIZE = 7
    x = jax.random.normal(k_x, (B, C, H, W), F32)

    # PyTorch Conv2d default init (kaiming_uniform, a=sqrt(5)) -> U(-1/sqrt(fan_in), ...)
    fan_in = 2 * KSIZE * KSIZE
    bound = 1.0 / math.sqrt(fan_in)
    conv_w = jax.random.uniform(k_w, (1, 2, KSIZE, KSIZE), F32, -bound, bound)

    out = spatial_attention_forward(x, conv_w, kernel_size=KSIZE)
    out = jax.block_until_ready(out)

    assert out.shape == (B, 1, H, W), out.shape
    assert bool(jnp.all(jnp.isfinite(out)))

    ref = jax.block_until_ready(spatial_attention_reference(x, conv_w, KSIZE))
    max_err = float(jnp.max(jnp.abs(out - ref)))
    assert bool(jnp.allclose(out, ref, atol=1e-5, rtol=1e-5)), max_err

    print("KERNEL_OK")
</pallas_src>

<mosaic_0001>
module attributes {stable_mosaic.version = 11 : i64} {
  func.func @_spatial_attention_kernel(%arg0: i32, %arg1: memref<98xf32, #tpu.memory_space<smem>>, %arg2: memref<1x4x22x22xf32, #tpu.memory_space<vmem>>, %arg3: memref<1x16x16xf32, #tpu.memory_space<vmem>>) attributes {dimension_semantics = [#tpu.dimension_semantics<parallel>], iteration_bounds = array<i64: 2>, scalar_prefetch = 0 : i64, scratch_operands = 0 : i64, tpu.core_type = #tpu.core_type<tc>, window_params = [{transform_indices = @transform_0, window_bounds = array<i64: 98>}, {transform_indices = @transform_1, window_bounds = array<i64: 1, 4, 22, 22>}, {transform_indices = @transform_2, window_bounds = array<i64: 1, 16, 16>}]} {
    %c0 = arith.constant 0 : index
    %c0_0 = arith.constant 0 : index
    %c0_1 = arith.constant 0 : index
    %c0_2 = arith.constant 0 : index
    %0 = vector.load %arg2[%c0, %c0_0, %c0_1, %c0_2] : memref<1x4x22x22xf32, #tpu.memory_space<vmem>>, vector<1x4x22x22xf32>
    %1 = vector.shape_cast %0 : vector<1x4x22x22xf32> to vector<4x22x22xf32>
    %cst = arith.constant dense<0.000000e+00> : vector<22x22xf32>
    %2 = vector.multi_reduction <add>, %1, %cst [0] : vector<4x22x22xf32> to vector<22x22xf32>
    %cst_3 = arith.constant 2.500000e-01 : f32
    %3 = vector.broadcast %cst_3 : f32 to vector<22x22xf32>
    %4 = arith.mulf %2, %3 : vector<22x22xf32>
    %cst_4 = arith.constant dense<0xFF800000> : vector<22x22xf32>
    %5 = vector.multi_reduction <maximumf>, %1, %cst_4 [0] : vector<4x22x22xf32> to vector<22x22xf32>
    %cst_5 = arith.constant 0.000000e+00 : f32
    %6 = vector.broadcast %cst_5 : f32 to vector<16x16xf32>
    %7 = vector.extract_strided_slice %4 {offsets = [0, 0], sizes = [16, 16], strides = [1, 1]} : vector<22x22xf32> to vector<16x16xf32>
    %8 = vector.extract_strided_slice %5 {offsets = [0, 0], sizes = [16, 16], strides = [1, 1]} : vector<22x22xf32> to vector<16x16xf32>
    %c0_6 = arith.constant 0 : index
    %9 = memref.load %arg1[%c0_6] : memref<98xf32, #tpu.memory_space<smem>>
    %10 = vector.broadcast %9 : f32 to vector<16x16xf32>
    %11 = arith.mulf %7, %10 : vector<16x16xf32>
    %12 = arith.addf %6, %11 : vector<16x16xf32>
    %c49 = arith.constant 49 : index
    %13 = memref.load %arg1[%c49] : memref<98xf32, #tpu.memory_space<smem>>
    %14 = vector.broadcast %13 : f32 to vector<16x16xf32>
    %15 = arith.mulf %8, %14 : vector<16x16xf32>
    %16 = arith.addf %12, %15 : vector<16x16xf32>
    %17 = vector.extract_strided_slice %4 {offsets = [0, 1], sizes = [16, 16], strides = [1, 1]} : vector<22x22xf32> to vector<16x16xf32>
    %18 = vector.extract_strided_slice %5 {offsets = [0, 1], sizes = [16, 16], strides = [1, 1]} : vector<22x22xf32> to vector<16x16xf32>
    %c1 = arith.constant 1 : index
    %19 = memref.load %arg1[%c1] : memref<98xf32, #tpu.memory_space<smem>>
    %20 = vector.broadcast %19 : f32 to vector<16x16xf32>
    %21 = arith.mulf %17, %20 : vector<16x16xf32>
    %22 = arith.addf %16, %21 : vector<16x16xf32>
    %c50 = arith.constant 50 : index
    %23 = memref.load %arg1[%c50] : memref<98xf32, #tpu.memory_space<smem>>
    %24 = vector.broadcast %23 : f32 to vector<16x16xf32>
    %25 = arith.mulf %18, %24 : vector<16x16xf32>
    %26 = arith.addf %22, %25 : vector<16x16xf32>
    %27 = vector.extract_strided_slice %4 {offsets = [0, 2], sizes = [16, 16], strides = [1, 1]} : vector<22x22xf32> to vector<16x16xf32>
    %28 = vector.extract_strided_slice %5 {offsets = [0, 2], sizes = [16, 16], strides = [1, 1]} : vector<22x22xf32> to vector<16x16xf32>
    %c2 = arith.constant 2 : index
    %29 = memref.load %arg1[%c2] : memref<98xf32, #tpu.memory_space<smem>>
    %30 = vector.broadcast %29 : f32 to vector<16x16xf32>
    %31 = arith.mulf %27, %30 : vector<16x16xf32>
    %32 = arith.addf %26, %31 : vector<16x16xf32>
    %c51 = arith.constant 51 : index
    %33 = memref.load %arg1[%c51] : memref<98xf32, #tpu.memory_space<smem>>
    %34 = vector.broadcast %33 : f32 to vector<16x16xf32>
    %35 = arith.mulf %28, %34 : vector<16x16xf32>
    %36 = arith.addf %32, %35 : vector<16x16xf32>
    %37 = vector.extract_strided_slice %4 {offsets = [0, 3], sizes = [16, 16], strides = [1, 1]} : vector<22x22xf32> to vector<16x16xf32>
    %38 = vector.extract_strided_slice %5 {offsets = [0, 3], sizes = [16, 16], strides = [1, 1]} : vector<22x22xf32> to vector<16x16xf32>
    %c3 = arith.constant 3 : index
    %39 = memref.load %arg1[%c3] : memref<98xf32, #tpu.memory_space<smem>>
    %40 = vector.broadcast %39 : f32 to vector<16x16xf32>
    %41 = arith.mulf %37, %40 : vector<16x16xf32>
    %42 = arith.addf %36, %41 : vector<16x16xf32>
    %c52 = arith.constant 52 : index
    %43 = memref.load %arg1[%c52] : memref<98xf32, #tpu.memory_space<smem>>
    %44 = vector.broadcast %43 : f32 to vector<16x16xf32>
    %45 = arith.mulf %38, %44 : vector<16x16xf32>
    %46 = arith.addf %42, %45 : vector<16x16xf32>
    %47 = vector.extract_strided_slice %4 {offsets = [0, 4], sizes = [16, 16], strides = [1, 1]} : vector<22x22xf32> to vector<16x16xf32>
    %48 = vector.extract_strided_slice %5 {offsets = [0, 4], sizes = [16, 16], strides = [1, 1]} : vector<22x22xf32> to vector<16x16xf32>
    %c4 = arith.constant 4 : index
    %49 = memref.load %arg1[%c4] : memref<98xf32, #tpu.memory_space<smem>>
    %50 = vector.broadcast %49 : f32 to vector<16x16xf32>
    %51 = arith.mulf %47, %50 : vector<16x16xf32>
    %52 = arith.addf %46, %51 : vector<16x16xf32>
    %c53 = arith.constant 53 : index
    %53 = memref.load %arg1[%c53] : memref<98xf32, #tpu.memory_space<smem>>
    %54 = vector.broadcast %53 : f32 to vector<16x16xf32>
    %55 = arith.mulf %48, %54 : vector<16x16xf32>
    %56 = arith.addf %52, %55 : vector<16x16xf32>
    %57 = vector.extract_strided_slice %4 {offsets = [0, 5], sizes = [16, 16], strides = [1, 1]} : vector<22x22xf32> to vector<16x16xf32>
    %58 = vector.extract_strided_slice %5 {offsets = [0, 5], sizes = [16, 16], strides = [1, 1]} : vector<22x22xf32> to vector<16x16xf32>
    %c5 = arith.constant 5 : index
    %59 = memref.load %arg1[%c5] : memref<98xf32, #tpu.memory_space<smem>>
    %60 = vector.broadcast %59 : f32 to vector<16x16xf32>
    %61 = arith.mulf %57, %60 : vector<16x16xf32>
    %62 = arith.addf %56, %61 : vector<16x16xf32>
    %c54 = arith.constant 54 : index
    %63 = memref.load %arg1[%c54] : memref<98xf32, #tpu.memory_space<smem>>
    %64 = vector.broadcast %63 : f32 to vector<16x16xf32>
    %65 = arith.mulf %58, %64 : vector<16x16xf32>
    %66 = arith.addf %62, %65 : vector<16x16xf32>
    %67 = vector.extract_strided_slice %4 {offsets = [0, 6], sizes = [16, 16], strides = [1, 1]} : vector<22x22xf32> to vector<16x16xf32>
    %68 = vector.extract_strided_slice %5 {offsets = [0, 6], sizes = [16, 16], strides = [1, 1]} : vector<22x22xf32> to vector<16x16xf32>
    %c6 = arith.constant 6 : index
    %69 = memref.load %arg1[%c6] : memref<98xf32, #tpu.memory_space<smem>>
    %70 = vector.broadcast %69 : f32 to vector<16x16xf32>
    %71 = arith.mulf %67, %70 : vector<16x16xf32>
    %72 = arith.addf %66, %71 : vector<16x16xf32>
    %c55 = arith.constant 55 : index
    %73 = memref.load %arg1[%c55] : memref<98xf32, #tpu.memory_space<smem>>
    %74 = vector.broadcast %73 : f32 to vector<16x16xf32>
    %75 = arith.mulf %68, %74 : vector<16x16xf32>
    %76 = arith.addf %72, %75 : vector<16x16xf32>
    %77 = vector.extract_strided_slice %4 {offsets = [1, 0], sizes = [16, 16], strides = [1, 1]} : vector<22x22xf32> to vector<16x16xf32>
    %78 = vector.extract_strided_slice %5 {offsets = [1, 0], sizes = [16, 16], strides = [1, 1]} : vector<22x22xf32> to vector<16x16xf32>
    %c7 = arith.constant 7 : index
    %79 = memref.load %arg1[%c7] : memref<98xf32, #tpu.memory_space<smem>>
    %80 = vector.broadcast %79 : f32 to vector<16x16xf32>
    %81 = arith.mulf %77, %80 : vector<16x16xf32>
    %82 = arith.addf %76, %81 : vector<16x16xf32>
    %c56 = arith.constant 56 : index
    %83 = memref.load %arg1[%c56] : memref<98xf32, #tpu.memory_space<smem>>
    %84 = vector.broadcast %83 : f32 to vector<16x16xf32>
    %85 = arith.mulf %78, %84 : vector<16x16xf32>
    %86 = arith.addf %82, %85 : vector<16x16xf32>
    %87 = vector.extract_strided_slice %4 {offsets = [1, 1], sizes = [16, 16], strides = [1, 1]} : vector<22x22xf32> to vector<16x16xf32>
    %88 = vector.extract_strided_slice %5 {offsets = [1, 1], sizes = [16, 16], strides = [1, 1]} : vector<22x22xf32> to vector<16x16xf32>
    %c8 = arith.constant 8 : index
    %89 = memref.load %arg1[%c8] : memref<98xf32, #tpu.memory_space<smem>>
    %90 = vector.broadcast %89 : f32 to vector<16x16xf32>
    %91 = arith.mulf %87, %90 : vector<16x16xf32>
    %92 = arith.addf %86, %91 : vector<16x16xf32>
    %c57 = arith.constant 57 : index
    %93 = memref.load %arg1[%c57] : memref<98xf32, #tpu.memory_space<smem>>
    %94 = vector.broadcast %93 : f32 to vector<16x16xf32>
    %95 = arith.mulf %88, %94 : vector<16x16xf32>
    %96 = arith.addf %92, %95 : vector<16x16xf32>
    %97 = vector.extract_strided_slice %4 {offsets = [1, 2], sizes = [16, 16], strides = [1, 1]} : vector<22x22xf32> to vector<16x16xf32>
    %98 = vector.extract_strided_slice %5 {offsets = [1, 2], sizes = [16, 16], strides = [1, 1]} : vector<22x22xf32> to vector<16x16xf32>
    %c9 = arith.constant 9 : index
    %99 = memref.load %arg1[%c9] : memref<98xf32, #tpu.memory_space<smem>>
    %100 = vector.broadcast %99 : f32 to vector<16x16xf32>
    %101 = arith.mulf %97, %100 : vector<16x16xf32>
    %102 = arith.addf %96, %101 : vector<16x16xf32>
    %c58 = arith.constant 58 : index
    %103 = memref.load %arg1[%c58] : memref<98xf32, #tpu.memory_space<smem>>
    %104 = vector.broadcast %103 : f32 to vector<16x16xf32>
    %105 = arith.mulf %98, %104 : vector<16x16xf32>
    %106 = arith.addf %102, %105 : vector<16x16xf32>
    %107 = vector.extract_strided_slice %4 {offsets = [1, 3], sizes = [16, 16], strides = [1, 1]} : vector<22x22xf32> to vector<16x16xf32>
    %108 = vector.extract_strided_slice %5 {offsets = [1, 3], sizes = [16, 16], strides = [1, 1]} : vector<22x22xf32> to vector<16x16xf32>
    %c10 = arith.constant 10 : index
    %109 = memref.load %arg1[%c10] : memref<98xf32, #tpu.memory_space<smem>>
    %110 = vector.broadcast %109 : f32 to vector<16x16xf32>
    %111 = arith.mulf %107, %110 : vector<16x16xf32>
    %112 = arith.addf %106, %111 : vector<16x16xf32>
    %c59 = arith.constant 59 : index
    %113 = memref.load %arg1[%c59] : memref<98xf32, #tpu.memory_space<smem>>
    %114 = vector.broadcast %113 : f32 to vector<16x16xf32>
    %115 = arith.mulf %108, %114 : vector<16x16xf32>
    %116 = arith.addf %112, %115 : vector<16x16xf32>
    %117 = vector.extract_strided_slice %4 {offsets = [1, 4], sizes = [16, 16], strides = [1, 1]} : vector<22x22xf32> to vector<16x16xf32>
    %118 = vector.extract_strided_slice %5 {offsets = [1, 4], sizes = [16, 16], strides = [1, 1]} : vector<22x22xf32> to vector<16x16xf32>
    %c11 = arith.constant 11 : index
    %119 = memref.load %arg1[%c11] : memref<98xf32, #tpu.memory_space<smem>>
    %120 = vector.broadcast %119 : f32 to vector<16x16xf32>
    %121 = arith.mulf %117, %120 : vector<16x16xf32>
    %122 = arith.addf %116, %121 : vector<16x16xf32>
    %c60 = arith.constant 60 : index
    %123 = memref.load %arg1[%c60] : memref<98xf32, #tpu.memory_space<smem>>
    %124 = vector.broadcast %123 : f32 to vector<16x16xf32>
    %125 = arith.mulf %118, %124 : vector<16x16xf32>
    %126 = arith.addf %122, %125 : vector<16x16xf32>
    %127 = vector.extract_strided_slice %4 {offsets = [1, 5], sizes = [16, 16], strides = [1, 1]} : vector<22x22xf32> to vector<16x16xf32>
    %128 = vector.extract_strided_slice %5 {offsets = [1, 5], sizes = [16, 16], strides = [1, 1]} : vector<22x22xf32> to vector<16x16xf32>
    %c12 = arith.constant 12 : index
    %129 = memref.load %arg1[%c12] : memref<98xf32, #tpu.memory_space<smem>>
    %130 = vector.broadcast %129 : f32 to vector<16x16xf32>
    %131 = arith.mulf %127, %130 : vector<16x16xf32>
    %132 = arith.addf %126, %131 : vector<16x16xf32>
    %c61 = arith.constant 61 : index
    %133 = memref.load %arg1[%c61] : memref<98xf32, #tpu.memory_space<smem>>
    %134 = vector.broadcast %133 : f32 to vector<16x16xf32>
    %135 = arith.mulf %128, %134 : vector<16x16xf32>
    %136 = arith.addf %132, %135 : vector<16x16xf32>
    %137 = vector.extract_strided_slice %4 {offsets = [1, 6], sizes = [16, 16], strides = [1, 1]} : vector<22x22xf32> to vector<16x16xf32>
    %138 = vector.extract_strided_slice %5 {offsets = [1, 6], sizes = [16, 16], strides = [1, 1]} : vector<22x22xf32> to vector<16x16xf32>
    %c13 = arith.constant 13 : index
    %139 = memref.load %arg1[%c13] : memref<98xf32, #tpu.memory_space<smem>>
    %140 = vector.broadcast %139 : f32 to vector<16x16xf32>
    %141 = arith.mulf %137, %140 : vector<16x16xf32>
    %142 = arith.addf %136, %141 : vector<16x16xf32>
    %c62 = arith.constant 62 : index
    %143 = memref.load %arg1[%c62] : memref<98xf32, #tpu.memory_space<smem>>
    %144 = vector.broadcast %143 : f32 to vector<16x16xf32>
    %145 = arith.mulf %138, %144 : vector<16x16xf32>
    %146 = arith.addf %142, %145 : vector<16x16xf32>
    %147 = vector.extract_strided_slice %4 {offsets = [2, 0], sizes = [16, 16], strides = [1, 1]} : vector<22x22xf32> to vector<16x16xf32>
    %148 = vector.extract_strided_slice %5 {offsets = [2, 0], sizes = [16, 16], strides = [1, 1]} : vector<22x22xf32> to vector<16x16xf32>
    %c14 = arith.constant 14 : index
    %149 = memref.load %arg1[%c14] : memref<98xf32, #tpu.memory_space<smem>>
    %150 = vector.broadcast %149 : f32 to vector<16x16xf32>
    %151 = arith.mulf %147, %150 : vector<16x16xf32>
    %152 = arith.addf %146, %151 : vector<16x16xf32>
    %c63 = arith.constant 63 : index
    %153 = memref.load %arg1[%c63] : memref<98xf32, #tpu.memory_space<smem>>
    %154 = vector.broadcast %153 : f32 to vector<16x16xf32>
    %155 = arith.mulf %148, %154 : vector<16x16xf32>
    %156 = arith.addf %152, %155 : vector<16x16xf32>
    %157 = vector.extract_strided_slice %4 {offsets = [2, 1], sizes = [16, 16], strides = [1, 1]} : vector<22x22xf32> to vector<16x16xf32>
    %158 = vector.extract_strided_slice %5 {offsets = [2, 1], sizes = [16, 16], strides = [1, 1]} : vector<22x22xf32> to vector<16x16xf32>
    %c15 = arith.constant 15 : index
    %159 = memref.load %arg1[%c15] : memref<98xf32, #tpu.memory_space<smem>>
    %160 = vector.broadcast %159 : f32 to vector<16x16xf32>
    %161 = arith.mulf %157, %160 : vector<16x16xf32>
    %162 = arith.addf %156, %161 : vector<16x16xf32>
    %c64 = arith.constant 64 : index
    %163 = memref.load %arg1[%c64] : memref<98xf32, #tpu.memory_space<smem>>
    %164 = vector.broadcast %163 : f32 to vector<16x16xf32>
    %165 = arith.mulf %158, %164 : vector<16x16xf32>
    %166 = arith.addf %162, %165 : vector<16x16xf32>
    %167 = vector.extract_strided_slice %4 {offsets = [2, 2], sizes = [16, 16], strides = [1, 1]} : vector<22x22xf32> to vector<16x16xf32>
    %168 = vector.extract_strided_slice %5 {offsets = [2, 2], sizes = [16, 16], strides = [1, 1]} : vector<22x22xf32> to vector<16x16xf32>
    %c16 = arith.constant 16 : index
    %169 = memref.load %arg1[%c16] : memref<98xf32, #tpu.memory_space<smem>>
    %170 = vector.broadcast %169 : f32 to vector<16x16xf32>
    %171 = arith.mulf %167, %170 : vector<16x16xf32>
    %172 = arith.addf %166, %171 : vector<16x16xf32>
    %c65 = arith.constant 65 : index
    %173 = memref.load %arg1[%c65] : memref<98xf32, #tpu.memory_space<smem>>
    %174 = vector.broadcast %173 : f32 to vector<16x16xf32>
    %175 = arith.mulf %168, %174 : vector<16x16xf32>
    %176 = arith.addf %172, %175 : vector<16x16xf32>
    %177 = vector.extract_strided_slice %4 {offsets = [2, 3], sizes = [16, 16], strides = [1, 1]} : vector<22x22xf32> to vector<16x16xf32>
    %178 = vector.extract_strided_slice %5 {offsets = [2, 3], sizes = [16, 16], strides = [1, 1]} : vector<22x22xf32> to vector<16x16xf32>
    %c17 = arith.constant 17 : index
    %179 = memref.load %arg1[%c17] : memref<98xf32, #tpu.memory_space<smem>>
    %180 = vector.broadcast %179 : f32 to vector<16x16xf32>
    %181 = arith.mulf %177, %180 : vector<16x16xf32>
    %182 = arith.addf %176, %181 : vector<16x16xf32>
    %c66 = arith.constant 66 : index
    %183 = memref.load %arg1[%c66] : memref<98xf32, #tpu.memory_space<smem>>
    %184 = vector.broadcast %183 : f32 to vector<16x16xf32>
    %185 = arith.mulf %178, %184 : vector<16x16xf32>
    %186 = arith.addf %182, %185 : vector<16x16xf32>
    %187 = vector.extract_strided_slice %4 {offsets = [2, 4], sizes = [16, 16], strides = [1, 1]} : vector<22x22xf32> to vector<16x16xf32>
    %188 = vector.extract_strided_slice %5 {offsets = [2, 4], sizes = [16, 16], strides = [1, 1]} : vector<22x22xf32> to vector<16x16xf32>
    %c18 = arith.constant 18 : index
    %189 = memref.load %arg1[%c18] : memref<98xf32, #tpu.memory_space<smem>>
    %190 = vector.broadcast %189 : f32 to vector<16x16xf32>
    %191 = arith.mulf %187, %190 : vector<16x16xf32>
    %192 = arith.addf %186, %191 : vector<16x16xf32>
    %c67 = arith.constant 67 : index
    %193 = memref.load %arg1[%c67] : memref<98xf32, #tpu.memory_space<smem>>
    %194 = vector.broadcast %193 : f32 to vector<16x16xf32>
    %195 = arith.mulf %188, %194 : vector<16x16xf32>
    %196 = arith.addf %192, %195 : vector<16x16xf32>
    %197 = vector.extract_strided_slice %4 {offsets = [2, 5], sizes = [16, 16], strides = [1, 1]} : vector<22x22xf32> to vector<16x16xf32>
    %198 = vector.extract_strided_slice %5 {offsets = [2, 5], sizes = [16, 16], strides = [1, 1]} : vector<22x22xf32> to vector<16x16xf32>
    %c19 = arith.constant 19 : index
    %199 = memref.load %arg1[%c19] : memref<98xf32, #tpu.memory_space<smem>>
    %200 = vector.broadcast %199 : f32 to vector<16x16xf32>
    %201 = arith.mulf %197, %200 : vector<16x16xf32>
    %202 = arith.addf %196, %201 : vector<16x16xf32>
    %c68 = arith.constant 68 : index
    %203 = memref.load %arg1[%c68] : memref<98xf32, #tpu.memory_space<smem>>
    %204 = vector.broadcast %203 : f32 to vector<16x16xf32>
    %205 = arith.mulf %198, %204 : vector<16x16xf32>
    %206 = arith.addf %202, %205 : vector<16x16xf32>
    %207 = vector.extract_strided_slice %4 {offsets = [2, 6], sizes = [16, 16], strides = [1, 1]} : vector<22x22xf32> to vector<16x16xf32>
    %208 = vector.extract_strided_slice %5 {offsets = [2, 6], sizes = [16, 16], strides = [1, 1]} : vector<22x22xf32> to vector<16x16xf32>
    %c20 = arith.constant 20 : index
    %209 = memref.load %arg1[%c20] : memref<98xf32, #tpu.memory_space<smem>>
    %210 = vector.broadcast %209 : f32 to vector<16x16xf32>
    %211 = arith.mulf %207, %210 : vector<16x16xf32>
    %212 = arith.addf %206, %211 : vector<16x16xf32>
    %c69 = arith.constant 69 : index
    %213 = memref.load %arg1[%c69] : memref<98xf32, #tpu.memory_space<smem>>
    %214 = vector.broadcast %213 : f32 to vector<16x16xf32>
    %215 = arith.mulf %208, %214 : vector<16x16xf32>
    %216 = arith.addf %212, %215 : vector<16x16xf32>
    %217 = vector.extract_strided_slice %4 {offsets = [3, 0], sizes = [16, 16], strides = [1, 1]} : vector<22x22xf32> to vector<16x16xf32>
    %218 = vector.extract_strided_slice %5 {offsets = [3, 0], sizes = [16, 16], strides = [1, 1]} : vector<22x22xf32> to vector<16x16xf32>
    %c21 = arith.constant 21 : index
    %219 = memref.load %arg1[%c21] : memref<98xf32, #tpu.memory_space<smem>>
    %220 = vector.broadcast %219 : f32 to vector<16x16xf32>
    %221 = arith.mulf %217, %220 : vector<16x16xf32>
    %222 = arith.addf %216, %221 : vector<16x16xf32>
    %c70 = arith.constant 70 : index
    %223 = memref.load %arg1[%c70] : memref<98xf32, #tpu.memory_space<smem>>
    %224 = vector.broadcast %223 : f32 to vector<16x16xf32>
    %225 = arith.mulf %218, %224 : vector<16x16xf32>
    %226 = arith.addf %222, %225 : vector<16x16xf32>
    %227 = vector.extract_strided_slice %4 {offsets = [3, 1], sizes = [16, 16], strides = [1, 1]} : vector<22x22xf32> to vector<16x16xf32>
    %228 = vector.extract_strided_slice %5 {offsets = [3, 1], sizes = [16, 16], strides = [1, 1]} : vector<22x22xf32> to vector<16x16xf32>
    %c22 = arith.constant 22 : index
    %229 = memref.load %arg1[%c22] : memref<98xf32, #tpu.memory_space<smem>>
    %230 = vector.broadcast %229 : f32 to vector<16x16xf32>
    %231 = arith.mulf %227, %230 : vector<16x16xf32>
    %232 = arith.addf %226, %231 : vector<16x16xf32>
    %c71 = arith.constant 71 : index
    %233 = memref.load %arg1[%c71] : memref<98xf32, #tpu.memory_space<smem>>
    %234 = vector.broadcast %233 : f32 to vector<16x16xf32>
    %235 = arith.mulf %228, %234 : vector<16x16xf32>
    %236 = arith.addf %232, %235 : vector<16x16xf32>
    %237 = vector.extract_strided_slice %4 {offsets = [3, 2], sizes = [16, 16], strides = [1, 1]} : vector<22x22xf32> to vector<16x16xf32>
    %238 = vector.extract_strided_slice %5 {offsets = [3, 2], sizes = [16, 16], strides = [1, 1]} : vector<22x22xf32> to vector<16x16xf32>
    %c23 = arith.constant 23 : index
    %239 = memref.load %arg1[%c23] : memref<98xf32, #tpu.memory_space<smem>>
    %240 = vector.broadcast %239 : f32 to vector<16x16xf32>
    %241 = arith.mulf %237, %240 : vector<16x16xf32>
    %242 = arith.addf %236, %241 : vector<16x16xf32>
    %c72 = arith.constant 72 : index
    %243 = memref.load %arg1[%c72] : memref<98xf32, #tpu.memory_space<smem>>
    %244 = vector.broadcast %243 : f32 to vector<16x16xf32>
    %245 = arith.mulf %238, %244 : vector<16x16xf32>
    %246 = arith.addf %242, %245 : vector<16x16xf32>
    %247 = vector.extract_strided_slice %4 {offsets = [3, 3], sizes = [16, 16], strides = [1, 1]} : vector<22x22xf32> to vector<16x16xf32>
    %248 = vector.extract_strided_slice %5 {offsets = [3, 3], sizes = [16, 16], strides = [1, 1]} : vector<22x22xf32> to vector<16x16xf32>
    %c24 = arith.constant 24 : index
    %249 = memref.load %arg1[%c24] : memref<98xf32, #tpu.memory_space<smem>>
    %250 = vector.broadcast %249 : f32 to vector<16x16xf32>
    %251 = arith.mulf %247, %250 : vector<16x16xf32>
    %252 = arith.addf %246, %251 : vector<16x16xf32>
    %c73 = arith.constant 73 : index
    %253 = memref.load %arg1[%c73] : memref<98xf32, #tpu.memory_space<smem>>
    %254 = vector.broadcast %253 : f32 to vector<16x16xf32>
    %255 = arith.mulf %248, %254 : vector<16x16xf32>
    %256 = arith.addf %252, %255 : vector<16x16xf32>
    %257 = vector.extract_strided_slice %4 {offsets = [3, 4], sizes = [16, 16], strides = [1, 1]} : vector<22x22xf32> to vector<16x16xf32>
    %258 = vector.extract_strided_slice %5 {offsets = [3, 4], sizes = [16, 16], strides = [1, 1]} : vector<22x22xf32> to vector<16x16xf32>
    %c25 = arith.constant 25 : index
    %259 = memref.load %arg1[%c25] : memref<98xf32, #tpu.memory_space<smem>>
    %260 = vector.broadcast %259 : f32 to vector<16x16xf32>
    %261 = arith.mulf %257, %260 : vector<16x16xf32>
    %262 = arith.addf %256, %261 : vector<16x16xf32>
    %c74 = arith.constant 74 : index
    %263 = memref.load %arg1[%c74] : memref<98xf32, #tpu.memory_space<smem>>
    %264 = vector.broadcast %263 : f32 to vector<16x16xf32>
    %265 = arith.mulf %258, %264 : vector<16x16xf32>
    %266 = arith.addf %262, %265 : vector<16x16xf32>
    %267 = vector.extract_strided_slice %4 {offsets = [3, 5], sizes = [16, 16], strides = [1, 1]} : vector<22x22xf32> to vector<16x16xf32>
    %268 = vector.extract_strided_slice %5 {offsets = [3, 5], sizes = [16, 16], strides = [1, 1]} : vector<22x22xf32> to vector<16x16xf32>
    %c26 = arith.constant 26 : index
    %269 = memref.load %arg1[%c26] : memref<98xf32, #tpu.memory_space<smem>>
    %270 = vector.broadcast %269 : f32 to vector<16x16xf32>
    %271 = arith.mulf %267, %270 : vector<16x16xf32>
    %272 = arith.addf %266, %271 : vector<16x16xf32>
    %c75 = arith.constant 75 : index
    %273 = memref.load %arg1[%c75] : memref<98xf32, #tpu.memory_space<smem>>
    %274 = vector.broadcast %273 : f32 to vector<16x16xf32>
    %275 = arith.mulf %268, %274 : vector<16x16xf32>
    %276 = arith.addf %272, %275 : vector<16x16xf32>
    %277 = vector.extract_strided_slice %4 {offsets = [3, 6], sizes = [16, 16], strides = [1, 1]} : vector<22x22xf32> to vector<16x16xf32>
    %278 = vector.extract_strided_slice %5 {offsets = [3, 6], sizes = [16, 16], strides = [1, 1]} : vector<22x22xf32> to vector<16x16xf32>
    %c27 = arith.constant 27 : index
    %279 = memref.load %arg1[%c27] : memref<98xf32, #tpu.memory_space<smem>>
    %280 = vector.broadcast %279 : f32 to vector<16x16xf32>
    %281 = arith.mulf %277, %280 : vector<16x16xf32>
    %282 = arith.addf %276, %281 : vector<16x16xf32>
    %c76 = arith.constant 76 : index
    %283 = memref.load %arg1[%c76] : memref<98xf32, #tpu.memory_space<smem>>
    %284 = vector.broadcast %283 : f32 to vector<16x16xf32>
    %285 = arith.mulf %278, %284 : vector<16x16xf32>
    %286 = arith.addf %282, %285 : vector<16x16xf32>
    %287 = vector.extract_strided_slice %4 {offsets = [4, 0], sizes = [16, 16], strides = [1, 1]} : vector<22x22xf32> to vector<16x16xf32>
    %288 = vector.extract_strided_slice %5 {offsets = [4, 0], sizes = [16, 16], strides = [1, 1]} : vector<22x22xf32> to vector<16x16xf32>
    %c28 = arith.constant 28 : index
    %289 = memref.load %arg1[%c28] : memref<98xf32, #tpu.memory_space<smem>>
    %290 = vector.broadcast %289 : f32 to vector<16x16xf32>
    %291 = arith.mulf %287, %290 : vector<16x16xf32>
    %292 = arith.addf %286, %291 : vector<16x16xf32>
    %c77 = arith.constant 77 : index
    %293 = memref.load %arg1[%c77] : memref<98xf32, #tpu.memory_space<smem>>
    %294 = vector.broadcast %293 : f32 to vector<16x16xf32>
    %295 = arith.mulf %288, %294 : vector<16x16xf32>
    %296 = arith.addf %292, %295 : vector<16x16xf32>
    %297 = vector.extract_strided_slice %4 {offsets = [4, 1], sizes = [16, 16], strides = [1, 1]} : vector<22x22xf32> to vector<16x16xf32>
    %298 = vector.extract_strided_slice %5 {offsets = [4, 1], sizes = [16, 16], strides = [1, 1]} : vector<22x22xf32> to vector<16x16xf32>
    %c29 = arith.constant 29 : index
    %299 = memref.load %arg1[%c29] : memref<98xf32, #tpu.memory_space<smem>>
    %300 = vector.broadcast %299 : f32 to vector<16x16xf32>
    %301 = arith.mulf %297, %300 : vector<16x16xf32>
    %302 = arith.addf %296, %301 : vector<16x16xf32>
    %c78 = arith.constant 78 : index
    %303 = memref.load %arg1[%c78] : memref<98xf32, #tpu.memory_space<smem>>
    %304 = vector.broadcast %303 : f32 to vector<16x16xf32>
    %305 = arith.mulf %298, %304 : vector<16x16xf32>
    %306 = arith.addf %302, %305 : vector<16x16xf32>
    %307 = vector.extract_strided_slice %4 {offsets = [4, 2], sizes = [16, 16], strides = [1, 1]} : vector<22x22xf32> to vector<16x16xf32>
    %308 = vector.extract_strided_slice %5 {offsets = [4, 2], sizes = [16, 16], strides = [1, 1]} : vector<22x22xf32> to vector<16x16xf32>
    %c30 = arith.constant 30 : index
    %309 = memref.load %arg1[%c30] : memref<98xf32, #tpu.memory_space<smem>>
    %310 = vector.broadcast %309 : f32 to vector<16x16xf32>
    %311 = arith.mulf %307, %310 : vector<16x16xf32>
    %312 = arith.addf %306, %311 : vector<16x16xf32>
    %c79 = arith.constant 79 : index
    %313 = memref.load %arg1[%c79] : memref<98xf32, #tpu.memory_space<smem>>
    %314 = vector.broadcast %313 : f32 to vector<16x16xf32>
    %315 = arith.mulf %308, %314 : vector<16x16xf32>
    %316 = arith.addf %312, %315 : vector<16x16xf32>
    %317 = vector.extract_strided_slice %4 {offsets = [4, 3], sizes = [16, 16], strides = [1, 1]} : vector<22x22xf32> to vector<16x16xf32>
    %318 = vector.extract_strided_slice %5 {offsets = [4, 3], sizes = [16, 16], strides = [1, 1]} : vector<22x22xf32> to vector<16x16xf32>
    %c31 = arith.constant 31 : index
    %319 = memref.load %arg1[%c31] : memref<98xf32, #tpu.memory_space<smem>>
    %320 = vector.broadcast %319 : f32 to vector<16x16xf32>
    %321 = arith.mulf %317, %320 : vector<16x16xf32>
    %322 = arith.addf %316, %321 : vector<16x16xf32>
    %c80 = arith.constant 80 : index
    %323 = memref.load %arg1[%c80] : memref<98xf32, #tpu.memory_space<smem>>
    %324 = vector.broadcast %323 : f32 to vector<16x16xf32>
    %325 = arith.mulf %318, %324 : vector<16x16xf32>
    %326 = arith.addf %322, %325 : vector<16x16xf32>
    %327 = vector.extract_strided_slice %4 {offsets = [4, 4], sizes = [16, 16], strides = [1, 1]} : vector<22x22xf32> to vector<16x16xf32>
    %328 = vector.extract_strided_slice %5 {offsets = [4, 4], sizes = [16, 16], strides = [1, 1]} : vector<22x22xf32> to vector<16x16xf32>
    %c32 = arith.constant 32 : index
    %329 = memref.load %arg1[%c32] : memref<98xf32, #tpu.memory_space<smem>>
    %330 = vector.broadcast %329 : f32 to vector<16x16xf32>
    %331 = arith.mulf %327, %330 : vector<16x16xf32>
    %332 = arith.addf %326, %331 : vector<16x16xf32>
    %c81 = arith.constant 81 : index
    %333 = memref.load %arg1[%c81] : memref<98xf32, #tpu.memory_space<smem>>
    %334 = vector.broadcast %333 : f32 to vector<16x16xf32>
    %335 = arith.mulf %328, %334 : vector<16x16xf32>
    %336 = arith.addf %332, %335 : vector<16x16xf32>
    %337 = vector.extract_strided_slice %4 {offsets = [4, 5], sizes = [16, 16], strides = [1, 1]} : vector<22x22xf32> to vector<16x16xf32>
    %338 = vector.extract_strided_slice %5 {offsets = [4, 5], sizes = [16, 16], strides = [1, 1]} : vector<22x22xf32> to vector<16x16xf32>
    %c33 = arith.constant 33 : index
    %339 = memref.load %arg1[%c33] : memref<98xf32, #tpu.memory_space<smem>>
    %340 = vector.broadcast %339 : f32 to vector<16x16xf32>
    %341 = arith.mulf %337, %340 : vector<16x16xf32>
    %342 = arith.addf %336, %341 : vector<16x16xf32>
    %c82 = arith.constant 82 : index
    %343 = memref.load %arg1[%c82] : memref<98xf32, #tpu.memory_space<smem>>
    %344 = vector.broadcast %343 : f32 to vector<16x16xf32>
    %345 = arith.mulf %338, %344 : vector<16x16xf32>
    %346 = arith.addf %342, %345 : vector<16x16xf32>
    %347 = vector.extract_strided_slice %4 {offsets = [4, 6], sizes = [16, 16], strides = [1, 1]} : vector<22x22xf32> to vector<16x16xf32>
    %348 = vector.extract_strided_slice %5 {offsets = [4, 6], sizes = [16, 16], strides = [1, 1]} : vector<22x22xf32> to vector<16x16xf32>
    %c34 = arith.constant 34 : index
    %349 = memref.load %arg1[%c34] : memref<98xf32, #tpu.memory_space<smem>>
    %350 = vector.broadcast %349 : f32 to vector<16x16xf32>
    %351 = arith.mulf %347, %350 : vector<16x16xf32>
    %352 = arith.addf %346, %351 : vector<16x16xf32>
    %c83 = arith.constant 83 : index
    %353 = memref.load %arg1[%c83] : memref<98xf32, #tpu.memory_space<smem>>
    %354 = vector.broadcast %353 : f32 to vector<16x16xf32>
    %355 = arith.mulf %348, %354 : vector<16x16xf32>
    %356 = arith.addf %352, %355 : vector<16x16xf32>
    %357 = vector.extract_strided_slice %4 {offsets = [5, 0], sizes = [16, 16], strides = [1, 1]} : vector<22x22xf32> to vector<16x16xf32>
    %358 = vector.extract_strided_slice %5 {offsets = [5, 0], sizes = [16, 16], strides = [1, 1]} : vector<22x22xf32> to vector<16x16xf32>
    %c35 = arith.constant 35 : index
    %359 = memref.load %arg1[%c35] : memref<98xf32, #tpu.memory_space<smem>>
    %360 = vector.broadcast %359 : f32 to vector<16x16xf32>
    %361 = arith.mulf %357, %360 : vector<16x16xf32>
    %362 = arith.addf %356, %361 : vector<16x16xf32>
    %c84 = arith.constant 84 : index
    %363 = memref.load %arg1[%c84] : memref<98xf32, #tpu.memory_space<smem>>
    %364 = vector.broadcast %363 : f32 to vector<16x16xf32>
    %365 = arith.mulf %358, %364 : vector<16x16xf32>
    %366 = arith.addf %362, %365 : vector<16x16xf32>
    %367 = vector.extract_strided_slice %4 {offsets = [5, 1], sizes = [16, 16], strides = [1, 1]} : vector<22x22xf32> to vector<16x16xf32>
    %368 = vector.extract_strided_slice %5 {offsets = [5, 1], sizes = [16, 16], strides = [1, 1]} : vector<22x22xf32> to vector<16x16xf32>
    %c36 = arith.constant 36 : index
    %369 = memref.load %arg1[%c36] : memref<98xf32, #tpu.memory_space<smem>>
    %370 = vector.broadcast %369 : f32 to vector<16x16xf32>
    %371 = arith.mulf %367, %370 : vector<16x16xf32>
    %372 = arith.addf %366, %371 : vector<16x16xf32>
    %c85 = arith.constant 85 : index
    %373 = memref.load %arg1[%c85] : memref<98xf32, #tpu.memory_space<smem>>
    %374 = vector.broadcast %373 : f32 to vector<16x16xf32>
    %375 = arith.mulf %368, %374 : vector<16x16xf32>
    %376 = arith.addf %372, %375 : vector<16x16xf32>
    %377 = vector.extract_strided_slice %4 {offsets = [5, 2], sizes = [16, 16], strides = [1, 1]} : vector<22x22xf32> to vector<16x16xf32>
    %378 = vector.extract_strided_slice %5 {offsets = [5, 2], sizes = [16, 16], strides = [1, 1]} : vector<22x22xf32> to vector<16x16xf32>
    %c37 = arith.constant 37 : index
    %379 = memref.load %arg1[%c37] : memref<98xf32, #tpu.memory_space<smem>>
    %380 = vector.broadcast %379 : f32 to vector<16x16xf32>
    %381 = arith.mulf %377, %380 : vector<16x16xf32>
    %382 = arith.addf %376, %381 : vector<16x16xf32>
    %c86 = arith.constant 86 : index
    %383 = memref.load %arg1[%c86] : memref<98xf32, #tpu.memory_space<smem>>
    %384 = vector.broadcast %383 : f32 to vector<16x16xf32>
    %385 = arith.mulf %378, %384 : vector<16x16xf32>
    %386 = arith.addf %382, %385 : vector<16x16xf32>
    %387 = vector.extract_strided_slice %4 {offsets = [5, 3], sizes = [16, 16], strides = [1, 1]} : vector<22x22xf32> to vector<16x16xf32>
    %388 = vector.extract_strided_slice %5 {offsets = [5, 3], sizes = [16, 16], strides = [1, 1]} : vector<22x22xf32> to vector<16x16xf32>
    %c38 = arith.constant 38 : index
    %389 = memref.load %arg1[%c38] : memref<98xf32, #tpu.memory_space<smem>>
    %390 = vector.broadcast %389 : f32 to vector<16x16xf32>
    %391 = arith.mulf %387, %390 : vector<16x16xf32>
    %392 = arith.addf %386, %391 : vector<16x16xf32>
    %c87 = arith.constant 87 : index
    %393 = memref.load %arg1[%c87] : memref<98xf32, #tpu.memory_space<smem>>
    %394 = vector.broadcast %393 : f32 to vector<16x16xf32>
    %395 = arith.mulf %388, %394 : vector<16x16xf32>
    %396 = arith.addf %392, %395 : vector<16x16xf32>
    %397 = vector.extract_strided_slice %4 {offsets = [5, 4], sizes = [16, 16], strides = [1, 1]} : vector<22x22xf32> to vector<16x16xf32>
    %398 = vector.extract_strided_slice %5 {offsets = [5, 4], sizes = [16, 16], strides = [1, 1]} : vector<22x22xf32> to vector<16x16xf32>
    %c39 = arith.constant 39 : index
    %399 = memref.load %arg1[%c39] : memref<98xf32, #tpu.memory_space<smem>>
    %400 = vector.broadcast %399 : f32 to vector<16x16xf32>
    %401 = arith.mulf %397, %400 : vector<16x16xf32>
    %402 = arith.addf %396, %401 : vector<16x16xf32>
    %c88 = arith.constant 88 : index
    %403 = memref.load %arg1[%c88] : memref<98xf32, #tpu.memory_space<smem>>
    %404 = vector.broadcast %403 : f32 to vector<16x16xf32>
    %405 = arith.mulf %398, %404 : vector<16x16xf32>
    %406 = arith.addf %402, %405 : vector<16x16xf32>
    %407 = vector.extract_strided_slice %4 {offsets = [5, 5], sizes = [16, 16], strides = [1, 1]} : vector<22x22xf32> to vector<16x16xf32>
    %408 = vector.extract_strided_slice %5 {offsets = [5, 5], sizes = [16, 16], strides = [1, 1]} : vector<22x22xf32> to vector<16x16xf32>
    %c40 = arith.constant 40 : index
    %409 = memref.load %arg1[%c40] : memref<98xf32, #tpu.memory_space<smem>>
    %410 = vector.broadcast %409 : f32 to vector<16x16xf32>
    %411 = arith.mulf %407, %410 : vector<16x16xf32>
    %412 = arith.addf %406, %411 : vector<16x16xf32>
    %c89 = arith.constant 89 : index
    %413 = memref.load %arg1[%c89] : memref<98xf32, #tpu.memory_space<smem>>
    %414 = vector.broadcast %413 : f32 to vector<16x16xf32>
    %415 = arith.mulf %408, %414 : vector<16x16xf32>
    %416 = arith.addf %412, %415 : vector<16x16xf32>
    %417 = vector.extract_strided_slice %4 {offsets = [5, 6], sizes = [16, 16], strides = [1, 1]} : vector<22x22xf32> to vector<16x16xf32>
    %418 = vector.extract_strided_slice %5 {offsets = [5, 6], sizes = [16, 16], strides = [1, 1]} : vector<22x22xf32> to vector<16x16xf32>
    %c41 = arith.constant 41 : index
    %419 = memref.load %arg1[%c41] : memref<98xf32, #tpu.memory_space<smem>>
    %420 = vector.broadcast %419 : f32 to vector<16x16xf32>
    %421 = arith.mulf %417, %420 : vector<16x16xf32>
    %422 = arith.addf %416, %421 : vector<16x16xf32>
    %c90 = arith.constant 90 : index
    %423 = memref.load %arg1[%c90] : memref<98xf32, #tpu.memory_space<smem>>
    %424 = vector.broadcast %423 : f32 to vector<16x16xf32>
    %425 = arith.mulf %418, %424 : vector<16x16xf32>
    %426 = arith.addf %422, %425 : vector<16x16xf32>
    %427 = vector.extract_strided_slice %4 {offsets = [6, 0], sizes = [16, 16], strides = [1, 1]} : vector<22x22xf32> to vector<16x16xf32>
    %428 = vector.extract_strided_slice %5 {offsets = [6, 0], sizes = [16, 16], strides = [1, 1]} : vector<22x22xf32> to vector<16x16xf32>
    %c42 = arith.constant 42 : index
    %429 = memref.load %arg1[%c42] : memref<98xf32, #tpu.memory_space<smem>>
    %430 = vector.broadcast %429 : f32 to vector<16x16xf32>
    %431 = arith.mulf %427, %430 : vector<16x16xf32>
    %432 = arith.addf %426, %431 : vector<16x16xf32>
    %c91 = arith.constant 91 : index
    %433 = memref.load %arg1[%c91] : memref<98xf32, #tpu.memory_space<smem>>
    %434 = vector.broadcast %433 : f32 to vector<16x16xf32>
    %435 = arith.mulf %428, %434 : vector<16x16xf32>
    %436 = arith.addf %432, %435 : vector<16x16xf32>
    %437 = vector.extract_strided_slice %4 {offsets = [6, 1], sizes = [16, 16], strides = [1, 1]} : vector<22x22xf32> to vector<16x16xf32>
    %438 = vector.extract_strided_slice %5 {offsets = [6, 1], sizes = [16, 16], strides = [1, 1]} : vector<22x22xf32> to vector<16x16xf32>
    %c43 = arith.constant 43 : index
    %439 = memref.load %arg1[%c43] : memref<98xf32, #tpu.memory_space<smem>>
    %440 = vector.broadcast %439 : f32 to vector<16x16xf32>
    %441 = arith.mulf %437, %440 : vector<16x16xf32>
    %442 = arith.addf %436, %441 : vector<16x16xf32>
    %c92 = arith.constant 92 : index
    %443 = memref.load %arg1[%c92] : memref<98xf32, #tpu.memory_space<smem>>
    %444 = vector.broadcast %443 : f32 to vector<16x16xf32>
    %445 = arith.mulf %438, %444 : vector<16x16xf32>
    %446 = arith.addf %442, %445 : vector<16x16xf32>
    %447 = vector.extract_strided_slice %4 {offsets = [6, 2], sizes = [16, 16], strides = [1, 1]} : vector<22x22xf32> to vector<16x16xf32>
    %448 = vector.extract_strided_slice %5 {offsets = [6, 2], sizes = [16, 16], strides = [1, 1]} : vector<22x22xf32> to vector<16x16xf32>
    %c44 = arith.constant 44 : index
    %449 = memref.load %arg1[%c44] : memref<98xf32, #tpu.memory_space<smem>>
    %450 = vector.broadcast %449 : f32 to vector<16x16xf32>
    %451 = arith.mulf %447, %450 : vector<16x16xf32>
    %452 = arith.addf %446, %451 : vector<16x16xf32>
    %c93 = arith.constant 93 : index
    %453 = memref.load %arg1[%c93] : memref<98xf32, #tpu.memory_space<smem>>
    %454 = vector.broadcast %453 : f32 to vector<16x16xf32>
    %455 = arith.mulf %448, %454 : vector<16x16xf32>
    %456 = arith.addf %452, %455 : vector<16x16xf32>
    %457 = vector.extract_strided_slice %4 {offsets = [6, 3], sizes = [16, 16], strides = [1, 1]} : vector<22x22xf32> to vector<16x16xf32>
    %458 = vector.extract_strided_slice %5 {offsets = [6, 3], sizes = [16, 16], strides = [1, 1]} : vector<22x22xf32> to vector<16x16xf32>
    %c45 = arith.constant 45 : index
    %459 = memref.load %arg1[%c45] : memref<98xf32, #tpu.memory_space<smem>>
    %460 = vector.broadcast %459 : f32 to vector<16x16xf32>
    %461 = arith.mulf %457, %460 : vector<16x16xf32>
    %462 = arith.addf %456, %461 : vector<16x16xf32>
    %c94 = arith.constant 94 : index
    %463 = memref.load %arg1[%c94] : memref<98xf32, #tpu.memory_space<smem>>
    %464 = vector.broadcast %463 : f32 to vector<16x16xf32>
    %465 = arith.mulf %458, %464 : vector<16x16xf32>
    %466 = arith.addf %462, %465 : vector<16x16xf32>
    %467 = vector.extract_strided_slice %4 {offsets = [6, 4], sizes = [16, 16], strides = [1, 1]} : vector<22x22xf32> to vector<16x16xf32>
    %468 = vector.extract_strided_slice %5 {offsets = [6, 4], sizes = [16, 16], strides = [1, 1]} : vector<22x22xf32> to vector<16x16xf32>
    %c46 = arith.constant 46 : index
    %469 = memref.load %arg1[%c46] : memref<98xf32, #tpu.memory_space<smem>>
    %470 = vector.broadcast %469 : f32 to vector<16x16xf32>
    %471 = arith.mulf %467, %470 : vector<16x16xf32>
    %472 = arith.addf %466, %471 : vector<16x16xf32>
    %c95 = arith.constant 95 : index
    %473 = memref.load %arg1[%c95] : memref<98xf32, #tpu.memory_space<smem>>
    %474 = vector.broadcast %473 : f32 to vector<16x16xf32>
    %475 = arith.mulf %468, %474 : vector<16x16xf32>
    %476 = arith.addf %472, %475 : vector<16x16xf32>
    %477 = vector.extract_strided_slice %4 {offsets = [6, 5], sizes = [16, 16], strides = [1, 1]} : vector<22x22xf32> to vector<16x16xf32>
    %478 = vector.extract_strided_slice %5 {offsets = [6, 5], sizes = [16, 16], strides = [1, 1]} : vector<22x22xf32> to vector<16x16xf32>
    %c47 = arith.constant 47 : index
    %479 = memref.load %arg1[%c47] : memref<98xf32, #tpu.memory_space<smem>>
    %480 = vector.broadcast %479 : f32 to vector<16x16xf32>
    %481 = arith.mulf %477, %480 : vector<16x16xf32>
    %482 = arith.addf %476, %481 : vector<16x16xf32>
    %c96 = arith.constant 96 : index
    %483 = memref.load %arg1[%c96] : memref<98xf32, #tpu.memory_space<smem>>
    %484 = vector.broadcast %483 : f32 to vector<16x16xf32>
    %485 = arith.mulf %478, %484 : vector<16x16xf32>
    %486 = arith.addf %482, %485 : vector<16x16xf32>
    %487 = vector.extract_strided_slice %4 {offsets = [6, 6], sizes = [16, 16], strides = [1, 1]} : vector<22x22xf32> to vector<16x16xf32>
    %488 = vector.extract_strided_slice %5 {offsets = [6, 6], sizes = [16, 16], strides = [1, 1]} : vector<22x22xf32> to vector<16x16xf32>
    %c48 = arith.constant 48 : index
    %489 = memref.load %arg1[%c48] : memref<98xf32, #tpu.memory_space<smem>>
    %490 = vector.broadcast %489 : f32 to vector<16x16xf32>
    %491 = arith.mulf %487, %490 : vector<16x16xf32>
    %492 = arith.addf %486, %491 : vector<16x16xf32>
    %c97 = arith.constant 97 : index
    %493 = memref.load %arg1[%c97] : memref<98xf32, #tpu.memory_space<smem>>
    %494 = vector.broadcast %493 : f32 to vector<16x16xf32>
    %495 = arith.mulf %488, %494 : vector<16x16xf32>
    %496 = arith.addf %492, %495 : vector<16x16xf32>
    %cst_7 = arith.constant 0.000000e+00 : f32
    %497 = vector.broadcast %cst_7 : f32 to vector<16x16xf32>
    %498 = arith.subf %497, %496 : vector<16x16xf32>
    %499 = math.exp %498 : vector<16x16xf32>
    %cst_8 = arith.constant 1.000000e+00 : f32
    %500 = vector.broadcast %cst_8 : f32 to vector<16x16xf32>
    %501 = arith.addf %500, %499 : vector<16x16xf32>
    %cst_9 = arith.constant 1.000000e+00 : f32
    %502 = vector.broadcast %cst_9 : f32 to vector<16x16xf32>
    %503 = arith.divf %502, %501 : vector<16x16xf32>
    %c0_10 = arith.constant 0 : index
    %c0_11 = arith.constant 0 : index
    %c0_12 = arith.constant 0 : index
    %504 = vector.load %arg3[%c0_10, %c0_11, %c0_12] : memref<1x16x16xf32, #tpu.memory_space<vmem>>, vector<1x16x16xf32>
    %505 = vector.shape_cast %504 : vector<1x16x16xf32> to vector<16x16xf32>
    %506 = vector.shape_cast %503 : vector<16x16xf32> to vector<1x16x16xf32>
    tpu.vector_store %arg3[%c0_10, %c0_11, %c0_12], %506 {strides = array<i32>} : memref<1x16x16xf32, #tpu.memory_space<vmem>>, vector<1x16x16xf32>,
    return
  }
  func.func @transform_0(%arg0: i32) -> i32 {
    %c0_i32 = arith.constant 0 : i32
    %c0_i32_0 = arith.constant 0 : i32
    return %c0_i32 : i32
  }
  func.func @transform_1(%arg0: i32) -> (i32, i32, i32, i32) {
    %c0_i32 = arith.constant 0 : i32
    %c0_i32_0 = arith.constant 0 : i32
    %c0_i32_1 = arith.constant 0 : i32
    %c0_i32_2 = arith.constant 0 : i32
    return %arg0, %c0_i32, %c0_i32_0, %c0_i32_1 : i32, i32, i32, i32
  }
  func.func @transform_2(%arg0: i32) -> (i32, i32, i32) {
    %c0_i32 = arith.constant 0 : i32
    %c0_i32_0 = arith.constant 0 : i32
    %c0_i32_1 = arith.constant 0 : i32
    return %arg0, %c0_i32, %c0_i32_0 : i32, i32, i32
  }
}

</mosaic_0001>

<llo_original>
// kernel: tpu_custom_call.1
$region0: #{tpu_custom_call.1}
  #allocation0 [shape = 'u32[]', space=smem, size = 0x4, offset = 0x4, fixed_abs, tag = 'smem constant byte address 0x4 - core index']
  #allocation1 [shape = 'u32[144,128]{1,0:T(1,128)}', space=vmem, size = 0x12000, scoped, tag = 'internal scratch']
  %s0 = inlined_call_operand.vmem [shape: f32[98], index: 0, kind: input, shape index: {}]
  %s1 = inlined_call_operand.vmem [shape: f32[2,4,22,22], index: 1, kind: input, shape index: {}]
  %s2 = inlined_call_operand.hbm [shape: f32[2,16,16], index: 2, kind: output, shape index: {}]
  %s3 = sld [smem:[#allocation0]]
  $region45: #{tpu_custom_call.1} parent=0
    _
  %s5 = ssub.s32 1, %s3
  %s6 = scalar_select 0, %s5, %s3
  $region1: #{tpu_custom_call.1} parent=0
    #allocation2 [shape = 'u8[512]{0}', space=smem, size = 0x200, scoped, tag = 'input window, operand 0, single buffered']
    #allocation3 [shape = 's32[2]{0}', space=sflag, size = 0x8, scoped, tag = 'scoped memory for tpu_custom_call.1']
    #allocation4 [shape = 's32[2]{0}', space=sflag, size = 0x8, scoped, tag = 'scoped memory for tpu_custom_call.1']
    #allocation5 [shape = 'u8[16384]{0}', space=vmem, size = 0x4000, scoped, tag = 'output window, operand 0']
    %7 = vsyncpa [#allocation4], 0
    %8 = vsyncpa [#allocation3], 0
    %s9 = scalar_lea.sflag [#allocation3], 1
    %10 = vsyncpa %s9, 0
    loop: start=0, step=1, limit=4
    $region2: #{tpu_custom_call.1} parent=1 // loop_pre_header
      _
    $region3: #{tpu_custom_call.1} parent=1 // loop_header
      %s12 = sphi 0, %s16
      %p13 = scmp.ge.s32.totalorder %s12, 4
      %s20 = sphi 0, %s20
      %s22 = sphi 0, %s20
      %s23 = sphi 0, %s22
      %s37 = sphi 0, %s23
      %s43 = sphi 0, %s45
      %s46 = sphi 0, %s43
      %s47 = sphi 0, %s46
      %s63 = sphi 0, %s47
      %s69 = sphi 0, %s71
      %s72 = sphi 0, %s69
      %s73 = sphi 0, %s72
      %s89 = sphi 0, %s73
    $region4: #{tpu_custom_call.1} parent=1 // loop_header_branch
      %15 = sbr.rel (%p13) target = $region8
    $region5: #{tpu_custom_call.1} parent=1 // loop_body
      %s17 = ssub.s32 %s12, 1
      %s18 = ssub.s32 %s12, 2
      %s19 = sadd.s32 %s12, 1
      %s21 = sadd.s32 %s20, 1
      %p24 = scmp.eq.s32.totalorder %s12, 1
      %p25 = scmp.ne.s32.totalorder %s20, %s22
      %p26 = scmp.eq.s32.totalorder %s12, 0
      %p27 = por %p25, %p26
      %p28 = scmp.ne.s32.totalorder %s20, %s22
      %p29 = scmp.eq.s32.totalorder %s17, 1
      %p30 = por %p28, %p29
      %p31 = scmp.ne.s32.totalorder %s22, %s23
      %p32 = scmp.eq.s32.totalorder %s17, 0
      %p33 = por %p31, %p32
      %p34 = scmp.ne.s32.totalorder %s22, %s23
      %p35 = scmp.eq.s32.totalorder %s18, 1
      %p36 = por %p34, %p35
      %p38 = scmp.ne.s32.totalorder %s23, %s37
      %p39 = scmp.eq.s32.totalorder %s18, 0
      %p40 = por %p38, %p39
      %s41 = ssub.s32 %s12, %s19
      %p42 = scmp.eq.s32.totalorder %s41, 0
      %s44 = sadd.s32 %s43, 1
      %s45 = scalar_select %p42, %s43, %s44
      %p48 = pneg %p42
      %p49 = scmp.eq.s32.totalorder %s12, 1
      %p50 = por %p48, %p49
      %p51 = scmp.ne.s32.totalorder %s43, %s46
      %p52 = scmp.eq.s32.totalorder %s12, 0
      %p53 = por %p51, %p52
      %p54 = scmp.ne.s32.totalorder %s43, %s46
      %p55 = scmp.eq.s32.totalorder %s17, 1
      %p56 = por %p54, %p55
      %p57 = scmp.ne.s32.totalorder %s46, %s47
      %p58 = scmp.eq.s32.totalorder %s17, 0
      %p59 = por %p57, %p58
      %p60 = scmp.ne.s32.totalorder %s46, %s47
      %p61 = scmp.eq.s32.totalorder %s18, 1
      %p62 = por %p60, %p61
      %p64 = scmp.ne.s32.totalorder %s47, %s63
      %p65 = scmp.eq.s32.totalorder %s18, 0
      %p66 = por %p64, %p65
      %s67 = ssub.s32 %s12, %s19
      %p68 = scmp.eq.s32.totalorder %s67, 0
      %s70 = sadd.s32 %s69, 1
      %s71 = scalar_select %p68, %s69, %s70
      %p74 = pneg %p68
      %p75 = scmp.eq.s32.totalorder %s12, 1
      %p76 = por %p74, %p75
      %p77 = scmp.ne.s32.totalorder %s69, %s72
      %p78 = scmp.eq.s32.totalorder %s12, 0
      %p79 = por %p77, %p78
      %p80 = scmp.ne.s32.totalorder %s69, %s72
      %p81 = scmp.eq.s32.totalorder %s17, 1
      %p82 = por %p80, %p81
      %p83 = scmp.ne.s32.totalorder %s72, %s73
      %p84 = scmp.eq.s32.totalorder %s17, 0
      %p85 = por %p83, %p84
      %p86 = scmp.ne.s32.totalorder %s72, %s73
      %p87 = scmp.eq.s32.totalorder %s18, 1
      %p88 = por %p86, %p87
      %p90 = scmp.ne.s32.totalorder %s73, %s89
      %p91 = scmp.eq.s32.totalorder %s18, 0
      %p92 = por %p90, %p91
      %p93 = scmp.le.s32.totalorder 1, %s12
      %p94 = scmp.lt.s32.totalorder %s12, 3
      %p95 = pnand %p93, %p94
      %p96 = pneg %p95
      // Predicated region
      $region9: #{tpu_custom_call.1} parent=5 // pred_check
        _
      $region10: #{tpu_custom_call.1} parent=5 // pred_check_branch
        %98 = sbr.rel (%p95) target = $region12
      $region11: #{tpu_custom_call.1} parent=5 // pred_region
        %s99 = ssub.s32 %s12, 1
        // Predicated region
        $region13: #{tpu_custom_call.1} parent=11 // pred_check
          %p100 = pneg %p33
        $region14: #{tpu_custom_call.1} parent=11 // pred_check_branch
          %102 = sbr.rel (%p100) target = $region16
        $region15: #{tpu_custom_call.1} parent=11 // pred_region
          %s104 = ssub.s32 16, 16
          %105 = vsyncadd [#allocation4], %s104
          %s107 = sshll.u32 %s0, 4
          %s108 = int_to_ptr.vmem [resolvable:$true] %s107
          %110 = dma.vmem_to_smem %s108, 16, [#allocation2], [#allocation4]
        $region16: #{tpu_custom_call.1} parent=11 // pred_fallthru
          _
      $region12: #{tpu_custom_call.1} parent=5 // pred_fallthru
        _
      %p111 = scmp.lt.s32.totalorder %s12, 2
      // Predicated region
      $region17: #{tpu_custom_call.1} parent=5 // pred_check
        %p112 = pneg %p111
      $region18: #{tpu_custom_call.1} parent=5 // pred_check_branch
        %114 = sbr.rel (%p112) target = $region20
      $region19: #{tpu_custom_call.1} parent=5 // pred_region
        // Predicated region
        $region21: #{tpu_custom_call.1} parent=19 // pred_check
          %p115 = pneg %p53
        $region22: #{tpu_custom_call.1} parent=19 // pred_check_branch
          %117 = sbr.rel (%p115) target = $region24
        $region23: #{tpu_custom_call.1} parent=19 // pred_region
          %p118 = scmp.lt.s32.totalorder %s12, 1
          %s119 = scalar_select %p118, %s12, 1
          %s120 = smul.addr %s119, 12
          %s121 = smul.addr %s120, 8
          %s122 = scalar_lea.vmem %s1, %s121
        $region24: #{tpu_custom_call.1} parent=19 // pred_fallthru
          _
      $region20: #{tpu_custom_call.1} parent=5 // pred_fallthru
        _
      %p123 = scmp.le.s32.totalorder 1, %s12
      %p124 = scmp.lt.s32.totalorder %s12, 3
      %p125 = pnand %p123, %p124
      %p126 = pneg %p125
      // Predicated region
      $region25: #{tpu_custom_call.1} parent=5 // pred_check
        _
      $region26: #{tpu_custom_call.1} parent=5 // pred_check_branch
        %128 = sbr.rel (%p125) target = $region28
      $region27: #{tpu_custom_call.1} parent=5 // pred_region
        %s129 = ssub.s32 %s12, 1
        // Predicated region
        $region29: #{tpu_custom_call.1} parent=27 // pred_check
          %p130 = pneg %p33
        $region30: #{tpu_custom_call.1} parent=27 // pred_check_branch
          %132 = sbr.rel (%p130) target = $region32
        $region31: #{tpu_custom_call.1} parent=27 // pred_region
          %133 = dma.done [#allocation4], 16
        $region32: #{tpu_custom_call.1} parent=27 // pred_fallthru
          _
        %134 = sfence
        %p135 = pneg %p33
        %p136 = pneg %p30
        %p137 = scmp.lt.s32.totalorder %s17, 1
        %s138 = scalar_select %p137, %s17, 1
        %s139 = smul.addr %s138, 12
        %s140 = smul.addr %s139, 8
        %s141 = scalar_lea.vmem %s1, %s140
        %p142 = pneg %p59
        %p143 = pneg %p56
        %p144 = pneg %p85
        %p145 = pneg %p82
        %s146 = sand.u32 %s72, 1
        %s147 = scalar_lea.sflag [#allocation3], %s146
        %s148 = sand.u32 %s72, 1
        %s149 = smul.addr %s148, 16
        %s150 = scalar_lea.vmem [#allocation5], %s149
        %p151 = scmp.lt.s32.totalorder %s17, 1
        %s152 = scalar_select %p151, %s17, 1
        %s153 = smul.addr %s152, 12
        %s154 = smul.addr %s153, 8
        %s155 = scalar_lea.vmem %s1, %s154
        %v156 = vld [vmem:[%s155] sm:$0xff]
        %v157 = vld [vmem:[%s155 + $0x8] sm:$0xff]
        %v158 = vld [vmem:[%s155 + $0x10] sm:$0x3f]
        %v159 = vld [vmem:[%s155 + $0x18] sm:$0xff]
        %v160 = vld [vmem:[%s155 + $0x20] sm:$0xff]
        %v161 = vld [vmem:[%s155 + $0x28] sm:$0x3f]
        %v162 = vld [vmem:[%s155 + $0x30] sm:$0xff]
        %v163 = vld [vmem:[%s155 + $0x38] sm:$0xff]
        %v164 = vld [vmem:[%s155 + $0x40] sm:$0x3f]
        %v165 = vld [vmem:[%s155 + $0x48] sm:$0xff]
        %v166 = vld [vmem:[%s155 + $0x50] sm:$0xff]
        %v167 = vld [vmem:[%s155 + $0x58] sm:$0x3f]
        %vm168 = vcmask 179200
        %v169 = vsel %vm168, %v156, 0.0
        %v170 = vsel %vm168, %v159, 0.0
        %v171 = vadd.f32 %v169, %v170
        %v172 = vsel %vm168, %v162, 0.0
        %v173 = vadd.f32 %v171, %v172
        %v174 = vsel %vm168, %v165, 0.0
        %v175 = vadd.f32 %v173, %v174
        %v176 = vsel %vm168, %v157, 0.0
        %v177 = vsel %vm168, %v160, 0.0
        %v178 = vadd.f32 %v176, %v177
        %v179 = vsel %vm168, %v163, 0.0
        %v180 = vadd.f32 %v178, %v179
        %v181 = vsel %vm168, %v166, 0.0
        %v182 = vadd.f32 %v180, %v181
        %vm183 = vcmask 177152
        %v184 = vsel %vm183, %v158, 0.0
        %v185 = vsel %vm183, %v161, 0.0
        %v186 = vadd.f32 %v184, %v185
        %v187 = vsel %vm183, %v164, 0.0
        %v188 = vadd.f32 %v186, %v187
        %v189 = vsel %vm183, %v167, 0.0
        %v190 = vadd.f32 %v188, %v189
        %v191 = vmul.f32 %v175, 0.25
        %v192 = vmul.f32 %v182, 0.25
        %v193 = vmul.f32 %v190, 0.25
        %v194 = vsel %vm168, %v156, -inf
        %v195 = vsel %vm168, %v159, -inf
        %v196 = vsel %vm168, %v162, -inf
        %v197 = vmax.f32 %v194, %v196
        %v198 = vsel %vm168, %v165, -inf
        %v199 = vmax.f32 %v195, %v198
        %v200 = vmax.f32 %v197, %v199
        %v201 = vsel %vm168, %v157, -inf
        %v202 = vsel %vm168, %v160, -inf
        %v203 = vsel %vm168, %v163, -inf
        %v204 = vmax.f32 %v201, %v203
        %v205 = vsel %vm168, %v166, -inf
        %v206 = vmax.f32 %v202, %v205
        %v207 = vmax.f32 %v204, %v206
        %v208 = vsel %vm183, %v158, -inf
        %v209 = vsel %vm183, %v161, -inf
        %v210 = vsel %vm183, %v164, -inf
        %v211 = vmax.f32 %v208, %v210
        %v212 = vsel %vm183, %v167, -inf
        %v213 = vmax.f32 %v209, %v212
        %v214 = vmax.f32 %v211, %v213
        %s215 = sld [smem:[#allocation2]]
        %v216 = vstv %s215
        %v217 = vmul.f32 %v191, %v216
        %v218 = vmul.f32 %v192, %v216
        %v219 = vadd.f32 %v217, 0.0
        %v220 = vadd.f32 %v218, 0.0
        %s221 = sld [smem:[#allocation2 + $0x31]]
        %v222 = vstv %s221
        %v223 = vmul.f32 %v200, %v222
        %v224 = vmul.f32 %v207, %v222
        %v225 = vadd.f32 %v219, %v223
        %v226 = vadd.f32 %v220, %v224
        %s227 = sld [smem:[#allocation2 + $0x1]]
        %v228 = vstv %s227
        %v229 = vmul.f32 %v191, %v228
        %v230 = vmul.f32 %v192, %v228
        %233 = vrot.lane.b32.xlu0 %v229, 127
        %v234 = vpop.permute.xlu0 %233
        %235 = vrot.lane.b32.xlu0 %v230, 127
        %v236 = vpop.permute.xlu0 %235
        %v239 = vadd.f32 %v225, %v234
        %v240 = vadd.f32 %v226, %v236
        %s241 = sld [smem:[#allocation2 + $0x32]]
        %v242 = vstv %s241
        %v243 = vmul.f32 %v200, %v242
        %v244 = vmul.f32 %v207, %v242
        %247 = vrot.lane.b32.xlu0 %v243, 127
        %v248 = vpop.permute.xlu0 %247
        %249 = vrot.lane.b32.xlu0 %v244, 127
        %v250 = vpop.permute.xlu0 %249
        %v253 = vadd.f32 %v239, %v248
        %v254 = vadd.f32 %v240, %v250
        %s255 = sld [smem:[#allocation2 + $0x2]]
        %v256 = vstv %s255
        %v257 = vmul.f32 %v191, %v256
        %v258 = vmul.f32 %v192, %v256
        %261 = vrot.lane.b32.xlu0 %v257, 126
        %v262 = vpop.permute.xlu0 %261
        %263 = vrot.lane.b32.xlu0 %v258, 126
        %v264 = vpop.permute.xlu0 %263
        %v267 = vadd.f32 %v253, %v262
        %v268 = vadd.f32 %v254, %v264
        %s269 = sld [smem:[#allocation2 + $0x33]]
        %v270 = vstv %s269
        %v271 = vmul.f32 %v200, %v270
        %v272 = vmul.f32 %v207, %v270
        %275 = vrot.lane.b32.xlu0 %v271, 126
        %v276 = vpop.permute.xlu0 %275
        %277 = vrot.lane.b32.xlu0 %v272, 126
        %v278 = vpop.permute.xlu0 %277
        %v281 = vadd.f32 %v267, %v276
        %v282 = vadd.f32 %v268, %v278
        %s283 = sld [smem:[#allocation2 + $0x3]]
        %v284 = vstv %s283
        %v285 = vmul.f32 %v191, %v284
        %v286 = vmul.f32 %v192, %v284
        %289 = vrot.lane.b32.xlu0 %v285, 125
        %v290 = vpop.permute.xlu0 %289
        %291 = vrot.lane.b32.xlu0 %v286, 125
        %v292 = vpop.permute.xlu0 %291
        %v295 = vadd.f32 %v281, %v290
        %v296 = vadd.f32 %v282, %v292
        %s297 = sld [smem:[#allocation2 + $0x34]]
        %v298 = vstv %s297
        %v299 = vmul.f32 %v200, %v298
        %v300 = vmul.f32 %v207, %v298
        %303 = vrot.lane.b32.xlu0 %v299, 125
        %v304 = vpop.permute.xlu0 %303
        %305 = vrot.lane.b32.xlu0 %v300, 125
        %v306 = vpop.permute.xlu0 %305
        %v309 = vadd.f32 %v295, %v304
        %v310 = vadd.f32 %v296, %v306
        %s311 = sld [smem:[#allocation2 + $0x4]]
        %v312 = vstv %s311
        %v313 = vmul.f32 %v191, %v312
        %v314 = vmul.f32 %v192, %v312
        %317 = vrot.lane.b32.xlu0 %v313, 124
        %v318 = vpop.permute.xlu0 %317
        %319 = vrot.lane.b32.xlu0 %v314, 124
        %v320 = vpop.permute.xlu0 %319
        %v323 = vadd.f32 %v309, %v318
        %v324 = vadd.f32 %v310, %v320
        %s325 = sld [smem:[#allocation2 + $0x35]]
        %v326 = vstv %s325
        %v327 = vmul.f32 %v200, %v326
        %v328 = vmul.f32 %v207, %v326
        %331 = vrot.lane.b32.xlu0 %v327, 124
        %v332 = vpop.permute.xlu0 %331
        %333 = vrot.lane.b32.xlu0 %v328, 124
        %v334 = vpop.permute.xlu0 %333
        %v337 = vadd.f32 %v323, %v332
        %v338 = vadd.f32 %v324, %v334
        %s339 = sld [smem:[#allocation2 + $0x5]]
        %v340 = vstv %s339
        %v341 = vmul.f32 %v191, %v340
        %v342 = vmul.f32 %v192, %v340
        %345 = vrot.lane.b32.xlu0 %v341, 123
        %v346 = vpop.permute.xlu0 %345
        %347 = vrot.lane.b32.xlu0 %v342, 123
        %v348 = vpop.permute.xlu0 %347
        %v351 = vadd.f32 %v337, %v346
        %v352 = vadd.f32 %v338, %v348
        %s353 = sld [smem:[#allocation2 + $0x36]]
        %v354 = vstv %s353
        %v355 = vmul.f32 %v200, %v354
        %v356 = vmul.f32 %v207, %v354
        %359 = vrot.lane.b32.xlu0 %v355, 123
        %v360 = vpop.permute.xlu0 %359
        %361 = vrot.lane.b32.xlu0 %v356, 123
        %v362 = vpop.permute.xlu0 %361
        %v365 = vadd.f32 %v351, %v360
        %v366 = vadd.f32 %v352, %v362
        %s367 = sld [smem:[#allocation2 + $0x6]]
        %v368 = vstv %s367
        %v369 = vmul.f32 %v191, %v368
        %v370 = vmul.f32 %v192, %v368
        %373 = vrot.lane.b32.xlu0 %v369, 122
        %v374 = vpop.permute.xlu0 %373
        %375 = vrot.lane.b32.xlu0 %v370, 122
        %v376 = vpop.permute.xlu0 %375
        %v379 = vadd.f32 %v365, %v374
        %v380 = vadd.f32 %v366, %v376
        %s381 = sld [smem:[#allocation2 + $0x37]]
        %v382 = vstv %s381
        %v383 = vmul.f32 %v200, %v382
        %v384 = vmul.f32 %v207, %v382
        %387 = vrot.lane.b32.xlu0 %v383, 122
        %v388 = vpop.permute.xlu0 %387
        %389 = vrot.lane.b32.xlu0 %v384, 122
        %v390 = vpop.permute.xlu0 %389
        %v393 = vadd.f32 %v379, %v388
        %v394 = vadd.f32 %v380, %v390
        %s395 = sld [smem:[#allocation2 + $0x7]]
        %v396 = vstv %s395
        %v397 = vmul.f32 %v191, %v396
        %v398 = vmul.f32 %v192, %v396
        %v399 = vmul.f32 %v193, %v396
        %vm403 = vcmask 1046528
        %v404 = vrot.slane %v397, 1
        %v405 = vrot.slane %v398, 1
        %v406 = vsel %vm403, %v404, %v405
        %v407 = vrot.slane %v399, 1
        %v408 = vsel %vm403, %v405, %v407
        %v411 = vadd.f32 %v393, %v406
        %v412 = vadd.f32 %v394, %v408
        %s413 = sld [smem:[#allocation2 + $0x38]]
        %v414 = vstv %s413
        %v415 = vmul.f32 %v200, %v414
        %v416 = vmul.f32 %v207, %v414
        %v417 = vmul.f32 %v214, %v414
        %v421 = vrot.slane %v415, 1
        %v422 = vrot.slane %v416, 1
        %v423 = vsel %vm403, %v421, %v422
        %v424 = vrot.slane %v417, 1
        %v425 = vsel %vm403, %v422, %v424
        %v428 = vadd.f32 %v411, %v423
        %v429 = vadd.f32 %v412, %v425
        %s430 = sld [smem:[#allocation2 + $0x8]]
        %v431 = vstv %s430
        %v432 = vmul.f32 %v191, %v431
        %v433 = vmul.f32 %v192, %v431
        %v434 = vmul.f32 %v193, %v431
        %v438 = vrot.slane %v432, 1
        %v439 = vrot.slane %v433, 1
        %v440 = vsel %vm403, %v438, %v439
        %v441 = vrot.slane %v434, 1
        %v442 = vsel %vm403, %v439, %v441
        %443 = vrot.lane.b32.xlu0 %v440, 127
        %v444 = vpop.permute.xlu0 %443
        %445 = vrot.lane.b32.xlu0 %v442, 127
        %v446 = vpop.permute.xlu0 %445
        %v449 = vadd.f32 %v428, %v444
        %v450 = vadd.f32 %v429, %v446
        %s451 = sld [smem:[#allocation2 + $0x39]]
        %v452 = vstv %s451
        %v453 = vmul.f32 %v200, %v452
        %v454 = vmul.f32 %v207, %v452
        %v455 = vmul.f32 %v214, %v452
        %v459 = vrot.slane %v453, 1
        %v460 = vrot.slane %v454, 1
        %v461 = vsel %vm403, %v459, %v460
        %v462 = vrot.slane %v455, 1
        %v463 = vsel %vm403, %v460, %v462
        %464 = vrot.lane.b32.xlu0 %v461, 127
        %v465 = vpop.permute.xlu0 %464
        %466 = vrot.lane.b32.xlu0 %v463, 127
        %v467 = vpop.permute.xlu0 %466
        %v470 = vadd.f32 %v449, %v465
        %v471 = vadd.f32 %v450, %v467
        %s472 = sld [smem:[#allocation2 + $0x9]]
        %v473 = vstv %s472
        %v474 = vmul.f32 %v191, %v473
        %v475 = vmul.f32 %v192, %v473
        %v476 = vmul.f32 %v193, %v473
        %v480 = vrot.slane %v474, 1
        %v481 = vrot.slane %v475, 1
        %v482 = vsel %vm403, %v480, %v481
        %v483 = vrot.slane %v476, 1
        %v484 = vsel %vm403, %v481, %v483
        %485 = vrot.lane.b32.xlu0 %v482, 126
        %v486 = vpop.permute.xlu0 %485
        %487 = vrot.lane.b32.xlu0 %v484, 126
        %v488 = vpop.permute.xlu0 %487
        %v491 = vadd.f32 %v470, %v486
        %v492 = vadd.f32 %v471, %v488
        %s493 = sld [smem:[#allocation2 + $0x3a]]
        %v494 = vstv %s493
        %v495 = vmul.f32 %v200, %v494
        %v496 = vmul.f32 %v207, %v494
        %v497 = vmul.f32 %v214, %v494
        %v501 = vrot.slane %v495, 1
        %v502 = vrot.slane %v496, 1
        %v503 = vsel %vm403, %v501, %v502
        %v504 = vrot.slane %v497, 1
        %v505 = vsel %vm403, %v502, %v504
        %506 = vrot.lane.b32.xlu0 %v503, 126
        %v507 = vpop.permute.xlu0 %506
        %508 = vrot.lane.b32.xlu0 %v505, 126
        %v509 = vpop.permute.xlu0 %508
        %v512 = vadd.f32 %v491, %v507
        %v513 = vadd.f32 %v492, %v509
        %s514 = sld [smem:[#allocation2 + $0xa]]
        %v515 = vstv %s514
        %v516 = vmul.f32 %v191, %v515
        %v517 = vmul.f32 %v192, %v515
        %v518 = vmul.f32 %v193, %v515
        %v522 = vrot.slane %v516, 1
        %v523 = vrot.slane %v517, 1
        %v524 = vsel %vm403, %v522, %v523
        %v525 = vrot.slane %v518, 1
        %v526 = vsel %vm403, %v523, %v525
        %527 = vrot.lane.b32.xlu0 %v524, 125
        %v528 = vpop.permute.xlu0 %527
        %529 = vrot.lane.b32.xlu0 %v526, 125
        %v530 = vpop.permute.xlu0 %529
        %v533 = vadd.f32 %v512, %v528
        %v534 = vadd.f32 %v513, %v530
        %s535 = sld [smem:[#allocation2 + $0x3b]]
        %v536 = vstv %s535
        %v537 = vmul.f32 %v200, %v536
        %v538 = vmul.f32 %v207, %v536
        %v539 = vmul.f32 %v214, %v536
        %v543 = vrot.slane %v537, 1
        %v544 = vrot.slane %v538, 1
        %v545 = vsel %vm403, %v543, %v544
        %v546 = vrot.slane %v539, 1
        %v547 = vsel %vm403, %v544, %v546
        %548 = vrot.lane.b32.xlu0 %v545, 125
        %v549 = vpop.permute.xlu0 %548
        %550 = vrot.lane.b32.xlu0 %v547, 125
        %v551 = vpop.permute.xlu0 %550
        %v554 = vadd.f32 %v533, %v549
        %v555 = vadd.f32 %v534, %v551
        %s556 = sld [smem:[#allocation2 + $0xb]]
        %v557 = vstv %s556
        %v558 = vmul.f32 %v191, %v557
        %v559 = vmul.f32 %v192, %v557
        %v560 = vmul.f32 %v193, %v557
        %v564 = vrot.slane %v558, 1
        %v565 = vrot.slane %v559, 1
        %v566 = vsel %vm403, %v564, %v565
        %v567 = vrot.slane %v560, 1
        %v568 = vsel %vm403, %v565, %v567
        %569 = vrot.lane.b32.xlu0 %v566, 124
        %v570 = vpop.permute.xlu0 %569
        %571 = vrot.lane.b32.xlu0 %v568, 124
        %v572 = vpop.permute.xlu0 %571
        %v575 = vadd.f32 %v554, %v570
        %v576 = vadd.f32 %v555, %v572
        %s577 = sld [smem:[#allocation2 + $0x3c]]
        %v578 = vstv %s577
        %v579 = vmul.f32 %v200, %v578
        %v580 = vmul.f32 %v207, %v578
        %v581 = vmul.f32 %v214, %v578
        %v585 = vrot.slane %v579, 1
        %v586 = vrot.slane %v580, 1
        %v587 = vsel %vm403, %v585, %v586
        %v588 = vrot.slane %v581, 1
        %v589 = vsel %vm403, %v586, %v588
        %590 = vrot.lane.b32.xlu0 %v587, 124
        %v591 = vpop.permute.xlu0 %590
        %592 = vrot.lane.b32.xlu0 %v589, 124
        %v593 = vpop.permute.xlu0 %592
        %v596 = vadd.f32 %v575, %v591
        %v597 = vadd.f32 %v576, %v593
        %s598 = sld [smem:[#allocation2 + $0xc]]
        %v599 = vstv %s598
        %v600 = vmul.f32 %v191, %v599
        %v601 = vmul.f32 %v192, %v599
        %v602 = vmul.f32 %v193, %v599
        %v606 = vrot.slane %v600, 1
        %v607 = vrot.slane %v601, 1
        %v608 = vsel %vm403, %v606, %v607
        %v609 = vrot.slane %v602, 1
        %v610 = vsel %vm403, %v607, %v609
        %611 = vrot.lane.b32.xlu0 %v608, 123
        %v612 = vpop.permute.xlu0 %611
        %613 = vrot.lane.b32.xlu0 %v610, 123
        %v614 = vpop.permute.xlu0 %613
        %v617 = vadd.f32 %v596, %v612
        %v618 = vadd.f32 %v597, %v614
        %s619 = sld [smem:[#allocation2 + $0x3d]]
        %v620 = vstv %s619
        %v621 = vmul.f32 %v200, %v620
        %v622 = vmul.f32 %v207, %v620
        %v623 = vmul.f32 %v214, %v620
        %v627 = vrot.slane %v621, 1
        %v628 = vrot.slane %v622, 1
        %v629 = vsel %vm403, %v627, %v628
        %v630 = vrot.slane %v623, 1
        %v631 = vsel %vm403, %v628, %v630
        %632 = vrot.lane.b32.xlu0 %v629, 123
        %v633 = vpop.permute.xlu0 %632
        %634 = vrot.lane.b32.xlu0 %v631, 123
        %v635 = vpop.permute.xlu0 %634
        %v638 = vadd.f32 %v617, %v633
        %v639 = vadd.f32 %v618, %v635
        %s640 = sld [smem:[#allocation2 + $0xd]]
        %v641 = vstv %s640
        %v642 = vmul.f32 %v191, %v641
        %v643 = vmul.f32 %v192, %v641
        %v644 = vmul.f32 %v193, %v641
        %v648 = vrot.slane %v642, 1
        %v649 = vrot.slane %v643, 1
        %v650 = vsel %vm403, %v648, %v649
        %v651 = vrot.slane %v644, 1
        %v652 = vsel %vm403, %v649, %v651
        %653 = vrot.lane.b32.xlu0 %v650, 122
        %v654 = vpop.permute.xlu0 %653
        %655 = vrot.lane.b32.xlu0 %v652, 122
        %v656 = vpop.permute.xlu0 %655
        %v659 = vadd.f32 %v638, %v654
        %v660 = vadd.f32 %v639, %v656
        %s661 = sld [smem:[#allocation2 + $0x3e]]
        %v662 = vstv %s661
        %v663 = vmul.f32 %v200, %v662
        %v664 = vmul.f32 %v207, %v662
        %v665 = vmul.f32 %v214, %v662
        %v669 = vrot.slane %v663, 1
        %v670 = vrot.slane %v664, 1
        %v671 = vsel %vm403, %v669, %v670
        %v672 = vrot.slane %v665, 1
        %v673 = vsel %vm403, %v670, %v672
        %674 = vrot.lane.b32.xlu0 %v671, 122
        %v675 = vpop.permute.xlu0 %674
        %676 = vrot.lane.b32.xlu0 %v673, 122
        %v677 = vpop.permute.xlu0 %676
        %v680 = vadd.f32 %v659, %v675
        %v681 = vadd.f32 %v660, %v677
        %s682 = sld [smem:[#allocation2 + $0xe]]
        %v683 = vstv %s682
        %v684 = vmul.f32 %v191, %v683
        %v685 = vmul.f32 %v192, %v683
        %v686 = vmul.f32 %v193, %v683
        %vm690 = vcmask 1045504
        %v691 = vrot.slane %v684, 2
        %v692 = vrot.slane %v685, 2
        %v693 = vsel %vm690, %v691, %v692
        %v694 = vrot.slane %v686, 2
        %v695 = vsel %vm690, %v692, %v694
        %v698 = vadd.f32 %v680, %v693
        %v699 = vadd.f32 %v681, %v695
        %s700 = sld [smem:[#allocation2 + $0x3f]]
        %v701 = vstv %s700
        %v702 = vmul.f32 %v200, %v701
        %v703 = vmul.f32 %v207, %v701
        %v704 = vmul.f32 %v214, %v701
        %v708 = vrot.slane %v702, 2
        %v709 = vrot.slane %v703, 2
        %v710 = vsel %vm690, %v708, %v709
        %v711 = vrot.slane %v704, 2
        %v712 = vsel %vm690, %v709, %v711
        %v715 = vadd.f32 %v698, %v710
        %v716 = vadd.f32 %v699, %v712
        %s717 = sld [smem:[#allocation2 + $0xf]]
        %v718 = vstv %s717
        %v719 = vmul.f32 %v191, %v718
        %v720 = vmul.f32 %v192, %v718
        %v721 = vmul.f32 %v193, %v718
        %v725 = vrot.slane %v719, 2
        %v726 = vrot.slane %v720, 2
        %v727 = vsel %vm690, %v725, %v726
        %v728 = vrot.slane %v721, 2
        %v729 = vsel %vm690, %v726, %v728
        %730 = vrot.lane.b32.xlu0 %v727, 127
        %v731 = vpop.permute.xlu0 %730
        %732 = vrot.lane.b32.xlu0 %v729, 127
        %v733 = vpop.permute.xlu0 %732
        %v736 = vadd.f32 %v715, %v731
        %v737 = vadd.f32 %v716, %v733
        %s738 = sld [smem:[#allocation2 + $0x40]]
        %v739 = vstv %s738
        %v740 = vmul.f32 %v200, %v739
        %v741 = vmul.f32 %v207, %v739
        %v742 = vmul.f32 %v214, %v739
        %v746 = vrot.slane %v740, 2
        %v747 = vrot.slane %v741, 2
        %v748 = vsel %vm690, %v746, %v747
        %v749 = vrot.slane %v742, 2
        %v750 = vsel %vm690, %v747, %v749
        %751 = vrot.lane.b32.xlu0 %v748, 127
        %v752 = vpop.permute.xlu0 %751
        %753 = vrot.lane.b32.xlu0 %v750, 127
        %v754 = vpop.permute.xlu0 %753
        %v757 = vadd.f32 %v736, %v752
        %v758 = vadd.f32 %v737, %v754
        %s759 = sld [smem:[#allocation2 + $0x10]]
        %v760 = vstv %s759
        %v761 = vmul.f32 %v191, %v760
        %v762 = vmul.f32 %v192, %v760
        %v763 = vmul.f32 %v193, %v760
        %v767 = vrot.slane %v761, 2
        %v768 = vrot.slane %v762, 2
        %v769 = vsel %vm690, %v767, %v768
        %v770 = vrot.slane %v763, 2
        %v771 = vsel %vm690, %v768, %v770
        %772 = vrot.lane.b32.xlu0 %v769, 126
        %v773 = vpop.permute.xlu0 %772
        %774 = vrot.lane.b32.xlu0 %v771, 126
        %v775 = vpop.permute.xlu0 %774
        %v778 = vadd.f32 %v757, %v773
        %v779 = vadd.f32 %v758, %v775
        %s780 = sld [smem:[#allocation2 + $0x41]]
        %v781 = vstv %s780
        %v782 = vmul.f32 %v200, %v781
        %v783 = vmul.f32 %v207, %v781
        %v784 = vmul.f32 %v214, %v781
        %v788 = vrot.slane %v782, 2
        %v789 = vrot.slane %v783, 2
        %v790 = vsel %vm690, %v788, %v789
        %v791 = vrot.slane %v784, 2
        %v792 = vsel %vm690, %v789, %v791
        %793 = vrot.lane.b32.xlu0 %v790, 126
        %v794 = vpop.permute.xlu0 %793
        %795 = vrot.lane.b32.xlu0 %v792, 126
        %v796 = vpop.permute.xlu0 %795
        %v799 = vadd.f32 %v778, %v794
        %v800 = vadd.f32 %v779, %v796
        %s801 = sld [smem:[#allocation2 + $0x11]]
        %v802 = vstv %s801
        %v803 = vmul.f32 %v191, %v802
        %v804 = vmul.f32 %v192, %v802
        %v805 = vmul.f32 %v193, %v802
        %v809 = vrot.slane %v803, 2
        %v810 = vrot.slane %v804, 2
        %v811 = vsel %vm690, %v809, %v810
        %v812 = vrot.slane %v805, 2
        %v813 = vsel %vm690, %v810, %v812
        %814 = vrot.lane.b32.xlu0 %v811, 125
        %v815 = vpop.permute.xlu0 %814
        %816 = vrot.lane.b32.xlu0 %v813, 125
        %v817 = vpop.permute.xlu0 %816
        %v820 = vadd.f32 %v799, %v815
        %v821 = vadd.f32 %v800, %v817
        %s822 = sld [smem:[#allocation2 + $0x42]]
        %v823 = vstv %s822
        %v824 = vmul.f32 %v200, %v823
        %v825 = vmul.f32 %v207, %v823
        %v826 = vmul.f32 %v214, %v823
        %v830 = vrot.slane %v824, 2
        %v831 = vrot.slane %v825, 2
        %v832 = vsel %vm690, %v830, %v831
        %v833 = vrot.slane %v826, 2
        %v834 = vsel %vm690, %v831, %v833
        %835 = vrot.lane.b32.xlu0 %v832, 125
        %v836 = vpop.permute.xlu0 %835
        %837 = vrot.lane.b32.xlu0 %v834, 125
        %v838 = vpop.permute.xlu0 %837
        %v841 = vadd.f32 %v820, %v836
        %v842 = vadd.f32 %v821, %v838
        %s843 = sld [smem:[#allocation2 + $0x12]]
        %v844 = vstv %s843
        %v845 = vmul.f32 %v191, %v844
        %v846 = vmul.f32 %v192, %v844
        %v847 = vmul.f32 %v193, %v844
        %v851 = vrot.slane %v845, 2
        %v852 = vrot.slane %v846, 2
        %v853 = vsel %vm690, %v851, %v852
        %v854 = vrot.slane %v847, 2
        %v855 = vsel %vm690, %v852, %v854
        %856 = vrot.lane.b32.xlu0 %v853, 124
        %v857 = vpop.permute.xlu0 %856
        %858 = vrot.lane.b32.xlu0 %v855, 124
        %v859 = vpop.permute.xlu0 %858
        %v862 = vadd.f32 %v841, %v857
        %v863 = vadd.f32 %v842, %v859
        %s864 = sld [smem:[#allocation2 + $0x43]]
        %v865 = vstv %s864
        %v866 = vmul.f32 %v200, %v865
        %v867 = vmul.f32 %v207, %v865
        %v868 = vmul.f32 %v214, %v865
        %v872 = vrot.slane %v866, 2
        %v873 = vrot.slane %v867, 2
        %v874 = vsel %vm690, %v872, %v873
        %v875 = vrot.slane %v868, 2
        %v876 = vsel %vm690, %v873, %v875
        %877 = vrot.lane.b32.xlu0 %v874, 124
        %v878 = vpop.permute.xlu0 %877
        %879 = vrot.lane.b32.xlu0 %v876, 124
        %v880 = vpop.permute.xlu0 %879
        %v883 = vadd.f32 %v862, %v878
        %v884 = vadd.f32 %v863, %v880
        %s885 = sld [smem:[#allocation2 + $0x13]]
        %v886 = vstv %s885
        %v887 = vmul.f32 %v191, %v886
        %v888 = vmul.f32 %v192, %v886
        %v889 = vmul.f32 %v193, %v886
        %v893 = vrot.slane %v887, 2
        %v894 = vrot.slane %v888, 2
        %v895 = vsel %vm690, %v893, %v894
        %v896 = vrot.slane %v889, 2
        %v897 = vsel %vm690, %v894, %v896
        %898 = vrot.lane.b32.xlu0 %v895, 123
        %v899 = vpop.permute.xlu0 %898
        %900 = vrot.lane.b32.xlu0 %v897, 123
        %v901 = vpop.permute.xlu0 %900
        %v904 = vadd.f32 %v883, %v899
        %v905 = vadd.f32 %v884, %v901
        %s906 = sld [smem:[#allocation2 + $0x44]]
        %v907 = vstv %s906
        %v908 = vmul.f32 %v200, %v907
        %v909 = vmul.f32 %v207, %v907
        %v910 = vmul.f32 %v214, %v907
        %v914 = vrot.slane %v908, 2
        %v915 = vrot.slane %v909, 2
        %v916 = vsel %vm690, %v914, %v915
        %v917 = vrot.slane %v910, 2
        %v918 = vsel %vm690, %v915, %v917
        %919 = vrot.lane.b32.xlu0 %v916, 123
        %v920 = vpop.permute.xlu0 %919
        %921 = vrot.lane.b32.xlu0 %v918, 123
        %v922 = vpop.permute.xlu0 %921
        %v925 = vadd.f32 %v904, %v920
        %v926 = vadd.f32 %v905, %v922
        %s927 = sld [smem:[#allocation2 + $0x14]]
        %v928 = vstv %s927
        %v929 = vmul.f32 %v191, %v928
        %v930 = vmul.f32 %v192, %v928
        %v931 = vmul.f32 %v193, %v928
        %v935 = vrot.slane %v929, 2
        %v936 = vrot.slane %v930, 2
        %v937 = vsel %vm690, %v935, %v936
        %v938 = vrot.slane %v931, 2
        %v939 = vsel %vm690, %v936, %v938
        %940 = vrot.lane.b32.xlu0 %v937, 122
        %v941 = vpop.permute.xlu0 %940
        %942 = vrot.lane.b32.xlu0 %v939, 122
        %v943 = vpop.permute.xlu0 %942
        %v946 = vadd.f32 %v925, %v941
        %v947 = vadd.f32 %v926, %v943
        %s948 = sld [smem:[#allocation2 + $0x45]]
        %v949 = vstv %s948
        %v950 = vmul.f32 %v200, %v949
        %v951 = vmul.f32 %v207, %v949
        %v952 = vmul.f32 %v214, %v949
        %v956 = vrot.slane %v950, 2
        %v957 = vrot.slane %v951, 2
        %v958 = vsel %vm690, %v956, %v957
        %v959 = vrot.slane %v952, 2
        %v960 = vsel %vm690, %v957, %v959
        %961 = vrot.lane.b32.xlu0 %v958, 122
        %v962 = vpop.permute.xlu0 %961
        %963 = vrot.lane.b32.xlu0 %v960, 122
        %v964 = vpop.permute.xlu0 %963
        %v967 = vadd.f32 %v946, %v962
        %v968 = vadd.f32 %v947, %v964
        %s969 = sld [smem:[#allocation2 + $0x15]]
        %v970 = vstv %s969
        %v971 = vmul.f32 %v191, %v970
        %v972 = vmul.f32 %v192, %v970
        %v973 = vmul.f32 %v193, %v970
        %vm977 = vcmask 1044480
        %v978 = vrot.slane %v971, 3
        %v979 = vrot.slane %v972, 3
        %v980 = vsel %vm977, %v978, %v979
        %v981 = vrot.slane %v973, 3
        %v982 = vsel %vm977, %v979, %v981
        %v985 = vadd.f32 %v967, %v980
        %v986 = vadd.f32 %v968, %v982
        %s987 = sld [smem:[#allocation2 + $0x46]]
        %v988 = vstv %s987
        %v989 = vmul.f32 %v200, %v988
        %v990 = vmul.f32 %v207, %v988
        %v991 = vmul.f32 %v214, %v988
        %v995 = vrot.slane %v989, 3
        %v996 = vrot.slane %v990, 3
        %v997 = vsel %vm977, %v995, %v996
        %v998 = vrot.slane %v991, 3
        %v999 = vsel %vm977, %v996, %v998
        %v1002 = vadd.f32 %v985, %v997
        %v1003 = vadd.f32 %v986, %v999
        %s1004 = sld [smem:[#allocation2 + $0x16]]
        %v1005 = vstv %s1004
        %v1006 = vmul.f32 %v191, %v1005
        %v1007 = vmul.f32 %v192, %v1005
        %v1008 = vmul.f32 %v193, %v1005
        %v1012 = vrot.slane %v1006, 3
        %v1013 = vrot.slane %v1007, 3
        %v1014 = vsel %vm977, %v1012, %v1013
        %v1015 = vrot.slane %v1008, 3
        %v1016 = vsel %vm977, %v1013, %v1015
        %1017 = vrot.lane.b32.xlu0 %v1014, 127
        %v1018 = vpop.permute.xlu0 %1017
        %1019 = vrot.lane.b32.xlu0 %v1016, 127
        %v1020 = vpop.permute.xlu0 %1019
        %v1023 = vadd.f32 %v1002, %v1018
        %v1024 = vadd.f32 %v1003, %v1020
        %s1025 = sld [smem:[#allocation2 + $0x47]]
        %v1026 = vstv %s1025
        %v1027 = vmul.f32 %v200, %v1026
        %v1028 = vmul.f32 %v207, %v1026
        %v1029 = vmul.f32 %v214, %v1026
        %v1033 = vrot.slane %v1027, 3
        %v1034 = vrot.slane %v1028, 3
        %v1035 = vsel %vm977, %v1033, %v1034
        %v1036 = vrot.slane %v1029, 3
        %v1037 = vsel %vm977, %v1034, %v1036
        %1038 = vrot.lane.b32.xlu0 %v1035, 127
        %v1039 = vpop.permute.xlu0 %1038
        %1040 = vrot.lane.b32.xlu0 %v1037, 127
        %v1041 = vpop.permute.xlu0 %1040
        %v1044 = vadd.f32 %v1023, %v1039
        %v1045 = vadd.f32 %v1024, %v1041
        %s1046 = sld [smem:[#allocation2 + $0x17]]
        %v1047 = vstv %s1046
        %v1048 = vmul.f32 %v191, %v1047
        %v1049 = vmul.f32 %v192, %v1047
        %v1050 = vmul.f32 %v193, %v1047
        %v1054 = vrot.slane %v1048, 3
        %v1055 = vrot.slane %v1049, 3
        %v1056 = vsel %vm977, %v1054, %v1055
        %v1057 = vrot.slane %v1050, 3
        %v1058 = vsel %vm977, %v1055, %v1057
        %1059 = vrot.lane.b32.xlu0 %v1056, 126
        %v1060 = vpop.permute.xlu0 %1059
        %1061 = vrot.lane.b32.xlu0 %v1058, 126
        %v1062 = vpop.permute.xlu0 %1061
        %v1065 = vadd.f32 %v1044, %v1060
        %v1066 = vadd.f32 %v1045, %v1062
        %s1067 = sld [smem:[#allocation2 + $0x48]]
        %v1068 = vstv %s1067
        %v1069 = vmul.f32 %v200, %v1068
        %v1070 = vmul.f32 %v207, %v1068
        %v1071 = vmul.f32 %v214, %v1068
        %v1075 = vrot.slane %v1069, 3
        %v1076 = vrot.slane %v1070, 3
        %v1077 = vsel %vm977, %v1075, %v1076
        %v1078 = vrot.slane %v1071, 3
        %v1079 = vsel %vm977, %v1076, %v1078
        %1080 = vrot.lane.b32.xlu0 %v1077, 126
        %v1081 = vpop.permute.xlu0 %1080
        %1082 = vrot.lane.b32.xlu0 %v1079, 126
        %v1083 = vpop.permute.xlu0 %1082
        %v1086 = vadd.f32 %v1065, %v1081
        %v1087 = vadd.f32 %v1066, %v1083
        %s1088 = sld [smem:[#allocation2 + $0x18]]
        %v1089 = vstv %s1088
        %v1090 = vmul.f32 %v191, %v1089
        %v1091 = vmul.f32 %v192, %v1089
        %v1092 = vmul.f32 %v193, %v1089
        %v1096 = vrot.slane %v1090, 3
        %v1097 = vrot.slane %v1091, 3
        %v1098 = vsel %vm977, %v1096, %v1097
        %v1099 = vrot.slane %v1092, 3
        %v1100 = vsel %vm977, %v1097, %v1099
        %1101 = vrot.lane.b32.xlu0 %v1098, 125
        %v1102 = vpop.permute.xlu0 %1101
        %1103 = vrot.lane.b32.xlu0 %v1100, 125
        %v1104 = vpop.permute.xlu0 %1103
        %v1107 = vadd.f32 %v1086, %v1102
        %v1108 = vadd.f32 %v1087, %v1104
        %s1109 = sld [smem:[#allocation2 + $0x49]]
        %v1110 = vstv %s1109
        %v1111 = vmul.f32 %v200, %v1110
        %v1112 = vmul.f32 %v207, %v1110
        %v1113 = vmul.f32 %v214, %v1110
        %v1117 = vrot.slane %v1111, 3
        %v1118 = vrot.slane %v1112, 3
        %v1119 = vsel %vm977, %v1117, %v1118
        %v1120 = vrot.slane %v1113, 3
        %v1121 = vsel %vm977, %v1118, %v1120
        %1122 = vrot.lane.b32.xlu0 %v1119, 125
        %v1123 = vpop.permute.xlu0 %1122
        %1124 = vrot.lane.b32.xlu0 %v1121, 125
        %v1125 = vpop.permute.xlu0 %1124
        %v1128 = vadd.f32 %v1107, %v1123
        %v1129 = vadd.f32 %v1108, %v1125
        %s1130 = sld [smem:[#allocation2 + $0x19]]
        %v1131 = vstv %s1130
        %v1132 = vmul.f32 %v191, %v1131
        %v1133 = vmul.f32 %v192, %v1131
        %v1134 = vmul.f32 %v193, %v1131
        %v1138 = vrot.slane %v1132, 3
        %v1139 = vrot.slane %v1133, 3
        %v1140 = vsel %vm977, %v1138, %v1139
        %v1141 = vrot.slane %v1134, 3
        %v1142 = vsel %vm977, %v1139, %v1141
        %1143 = vrot.lane.b32.xlu0 %v1140, 124
        %v1144 = vpop.permute.xlu0 %1143
        %1145 = vrot.lane.b32.xlu0 %v1142, 124
        %v1146 = vpop.permute.xlu0 %1145
        %v1149 = vadd.f32 %v1128, %v1144
        %v1150 = vadd.f32 %v1129, %v1146
        %s1151 = sld [smem:[#allocation2 + $0x4a]]
        %v1152 = vstv %s1151
        %v1153 = vmul.f32 %v200, %v1152
        %v1154 = vmul.f32 %v207, %v1152
        %v1155 = vmul.f32 %v214, %v1152
        %v1159 = vrot.slane %v1153, 3
        %v1160 = vrot.slane %v1154, 3
        %v1161 = vsel %vm977, %v1159, %v1160
        %v1162 = vrot.slane %v1155, 3
        %v1163 = vsel %vm977, %v1160, %v1162
        %1164 = vrot.lane.b32.xlu0 %v1161, 124
        %v1165 = vpop.permute.xlu0 %1164
        %1166 = vrot.lane.b32.xlu0 %v1163, 124
        %v1167 = vpop.permute.xlu0 %1166
        %v1170 = vadd.f32 %v1149, %v1165
        %v1171 = vadd.f32 %v1150, %v1167
        %s1172 = sld [smem:[#allocation2 + $0x1a]]
        %v1173 = vstv %s1172
        %v1174 = vmul.f32 %v191, %v1173
        %v1175 = vmul.f32 %v192, %v1173
        %v1176 = vmul.f32 %v193, %v1173
        %v1180 = vrot.slane %v1174, 3
        %v1181 = vrot.slane %v1175, 3
        %v1182 = vsel %vm977, %v1180, %v1181
        %v1183 = vrot.slane %v1176, 3
        %v1184 = vsel %vm977, %v1181, %v1183
        %1185 = vrot.lane.b32.xlu0 %v1182, 123
        %v1186 = vpop.permute.xlu0 %1185
        %1187 = vrot.lane.b32.xlu0 %v1184, 123
        %v1188 = vpop.permute.xlu0 %1187
        %v1191 = vadd.f32 %v1170, %v1186
        %v1192 = vadd.f32 %v1171, %v1188
        %s1193 = sld [smem:[#allocation2 + $0x4b]]
        %v1194 = vstv %s1193
        %v1195 = vmul.f32 %v200, %v1194
        %v1196 = vmul.f32 %v207, %v1194
        %v1197 = vmul.f32 %v214, %v1194
        %v1201 = vrot.slane %v1195, 3
        %v1202 = vrot.slane %v1196, 3
        %v1203 = vsel %vm977, %v1201, %v1202
        %v1204 = vrot.slane %v1197, 3
        %v1205 = vsel %vm977, %v1202, %v1204
        %1206 = vrot.lane.b32.xlu0 %v1203, 123
        %v1207 = vpop.permute.xlu0 %1206
        %1208 = vrot.lane.b32.xlu0 %v1205, 123
        %v1209 = vpop.permute.xlu0 %1208
        %v1212 = vadd.f32 %v1191, %v1207
        %v1213 = vadd.f32 %v1192, %v1209
        %s1214 = sld [smem:[#allocation2 + $0x1b]]
        %v1215 = vstv %s1214
        %v1216 = vmul.f32 %v191, %v1215
        %v1217 = vmul.f32 %v192, %v1215
        %v1218 = vmul.f32 %v193, %v1215
        %v1222 = vrot.slane %v1216, 3
        %v1223 = vrot.slane %v1217, 3
        %v1224 = vsel %vm977, %v1222, %v1223
        %v1225 = vrot.slane %v1218, 3
        %v1226 = vsel %vm977, %v1223, %v1225
        %1227 = vrot.lane.b32.xlu0 %v1224, 122
        %v1228 = vpop.permute.xlu0 %1227
        %1229 = vrot.lane.b32.xlu0 %v1226, 122
        %v1230 = vpop.permute.xlu0 %1229
        %v1233 = vadd.f32 %v1212, %v1228
        %v1234 = vadd.f32 %v1213, %v1230
        %s1235 = sld [smem:[#allocation2 + $0x4c]]
        %v1236 = vstv %s1235
        %v1237 = vmul.f32 %v200, %v1236
        %v1238 = vmul.f32 %v207, %v1236
        %v1239 = vmul.f32 %v214, %v1236
        %v1243 = vrot.slane %v1237, 3
        %v1244 = vrot.slane %v1238, 3
        %v1245 = vsel %vm977, %v1243, %v1244
        %v1246 = vrot.slane %v1239, 3
        %v1247 = vsel %vm977, %v1244, %v1246
        %1248 = vrot.lane.b32.xlu0 %v1245, 122
        %v1249 = vpop.permute.xlu0 %1248
        %1250 = vrot.lane.b32.xlu0 %v1247, 122
        %v1251 = vpop.permute.xlu0 %1250
        %v1254 = vadd.f32 %v1233, %v1249
        %v1255 = vadd.f32 %v1234, %v1251
        %s1256 = sld [smem:[#allocation2 + $0x1c]]
        %v1257 = vstv %s1256
        %v1258 = vmul.f32 %v191, %v1257
        %v1259 = vmul.f32 %v192, %v1257
        %v1260 = vmul.f32 %v193, %v1257
        %vm1264 = vcmask 1043456
        %v1265 = vrot.slane %v1258, 4
        %v1266 = vrot.slane %v1259, 4
        %v1267 = vsel %vm1264, %v1265, %v1266
        %v1268 = vrot.slane %v1260, 4
        %v1269 = vsel %vm1264, %v1266, %v1268
        %v1272 = vadd.f32 %v1254, %v1267
        %v1273 = vadd.f32 %v1255, %v1269
        %s1274 = sld [smem:[#allocation2 + $0x4d]]
        %v1275 = vstv %s1274
        %v1276 = vmul.f32 %v200, %v1275
        %v1277 = vmul.f32 %v207, %v1275
        %v1278 = vmul.f32 %v214, %v1275
        %v1282 = vrot.slane %v1276, 4
        %v1283 = vrot.slane %v1277, 4
        %v1284 = vsel %vm1264, %v1282, %v1283
        %v1285 = vrot.slane %v1278, 4
        %v1286 = vsel %vm1264, %v1283, %v1285
        %v1289 = vadd.f32 %v1272, %v1284
        %v1290 = vadd.f32 %v1273, %v1286
        %s1291 = sld [smem:[#allocation2 + $0x1d]]
        %v1292 = vstv %s1291
        %v1293 = vmul.f32 %v191, %v1292
        %v1294 = vmul.f32 %v192, %v1292
        %v1295 = vmul.f32 %v193, %v1292
        %v1299 = vrot.slane %v1293, 4
        %v1300 = vrot.slane %v1294, 4
        %v1301 = vsel %vm1264, %v1299, %v1300
        %v1302 = vrot.slane %v1295, 4
        %v1303 = vsel %vm1264, %v1300, %v1302
        %1304 = vrot.lane.b32.xlu0 %v1301, 127
        %v1305 = vpop.permute.xlu0 %1304
        %1306 = vrot.lane.b32.xlu0 %v1303, 127
        %v1307 = vpop.permute.xlu0 %1306
        %v1310 = vadd.f32 %v1289, %v1305
        %v1311 = vadd.f32 %v1290, %v1307
        %s1312 = sld [smem:[#allocation2 + $0x4e]]
        %v1313 = vstv %s1312
        %v1314 = vmul.f32 %v200, %v1313
        %v1315 = vmul.f32 %v207, %v1313
        %v1316 = vmul.f32 %v214, %v1313
        %v1320 = vrot.slane %v1314, 4
        %v1321 = vrot.slane %v1315, 4
        %v1322 = vsel %vm1264, %v1320, %v1321
        %v1323 = vrot.slane %v1316, 4
        %v1324 = vsel %vm1264, %v1321, %v1323
        %1325 = vrot.lane.b32.xlu0 %v1322, 127
        %v1326 = vpop.permute.xlu0 %1325
        %1327 = vrot.lane.b32.xlu0 %v1324, 127
        %v1328 = vpop.permute.xlu0 %1327
        %v1331 = vadd.f32 %v1310, %v1326
        %v1332 = vadd.f32 %v1311, %v1328
        %s1333 = sld [smem:[#allocation2 + $0x1e]]
        %v1334 = vstv %s1333
        %v1335 = vmul.f32 %v191, %v1334
        %v1336 = vmul.f32 %v192, %v1334
        %v1337 = vmul.f32 %v193, %v1334
        %v1341 = vrot.slane %v1335, 4
        %v1342 = vrot.slane %v1336, 4
        %v1343 = vsel %vm1264, %v1341, %v1342
        %v1344 = vrot.slane %v1337, 4
        %v1345 = vsel %vm1264, %v1342, %v1344
        %1346 = vrot.lane.b32.xlu0 %v1343, 126
        %v1347 = vpop.permute.xlu0 %1346
        %1348 = vrot.lane.b32.xlu0 %v1345, 126
        %v1349 = vpop.permute.xlu0 %1348
        %v1352 = vadd.f32 %v1331, %v1347
        %v1353 = vadd.f32 %v1332, %v1349
        %s1354 = sld [smem:[#allocation2 + $0x4f]]
        %v1355 = vstv %s1354
        %v1356 = vmul.f32 %v200, %v1355
        %v1357 = vmul.f32 %v207, %v1355
        %v1358 = vmul.f32 %v214, %v1355
        %v1362 = vrot.slane %v1356, 4
        %v1363 = vrot.slane %v1357, 4
        %v1364 = vsel %vm1264, %v1362, %v1363
        %v1365 = vrot.slane %v1358, 4
        %v1366 = vsel %vm1264, %v1363, %v1365
        %1367 = vrot.lane.b32.xlu0 %v1364, 126
        %v1368 = vpop.permute.xlu0 %1367
        %1369 = vrot.lane.b32.xlu0 %v1366, 126
        %v1370 = vpop.permute.xlu0 %1369
        %v1373 = vadd.f32 %v1352, %v1368
        %v1374 = vadd.f32 %v1353, %v1370
        %s1375 = sld [smem:[#allocation2 + $0x1f]]
        %v1376 = vstv %s1375
        %v1377 = vmul.f32 %v191, %v1376
        %v1378 = vmul.f32 %v192, %v1376
        %v1379 = vmul.f32 %v193, %v1376
        %v1383 = vrot.slane %v1377, 4
        %v1384 = vrot.slane %v1378, 4
        %v1385 = vsel %vm1264, %v1383, %v1384
        %v1386 = vrot.slane %v1379, 4
        %v1387 = vsel %vm1264, %v1384, %v1386
        %1388 = vrot.lane.b32.xlu0 %v1385, 125
        %v1389 = vpop.permute.xlu0 %1388
        %1390 = vrot.lane.b32.xlu0 %v1387, 125
        %v1391 = vpop.permute.xlu0 %1390
        %v1394 = vadd.f32 %v1373, %v1389
        %v1395 = vadd.f32 %v1374, %v1391
        %s1396 = sld [smem:[#allocation2 + $0x50]]
        %v1397 = vstv %s1396
        %v1398 = vmul.f32 %v200, %v1397
        %v1399 = vmul.f32 %v207, %v1397
        %v1400 = vmul.f32 %v214, %v1397
        %v1404 = vrot.slane %v1398, 4
        %v1405 = vrot.slane %v1399, 4
        %v1406 = vsel %vm1264, %v1404, %v1405
        %v1407 = vrot.slane %v1400, 4
        %v1408 = vsel %vm1264, %v1405, %v1407
        %1409 = vrot.lane.b32.xlu0 %v1406, 125
        %v1410 = vpop.permute.xlu0 %1409
        %1411 = vrot.lane.b32.xlu0 %v1408, 125
        %v1412 = vpop.permute.xlu0 %1411
        %v1415 = vadd.f32 %v1394, %v1410
        %v1416 = vadd.f32 %v1395, %v1412
        %s1417 = sld [smem:[#allocation2 + $0x20]]
        %v1418 = vstv %s1417
        %v1419 = vmul.f32 %v191, %v1418
        %v1420 = vmul.f32 %v192, %v1418
        %v1421 = vmul.f32 %v193, %v1418
        %v1425 = vrot.slane %v1419, 4
        %v1426 = vrot.slane %v1420, 4
        %v1427 = vsel %vm1264, %v1425, %v1426
        %v1428 = vrot.slane %v1421, 4
        %v1429 = vsel %vm1264, %v1426, %v1428
        %1430 = vrot.lane.b32.xlu0 %v1427, 124
        %v1431 = vpop.permute.xlu0 %1430
        %1432 = vrot.lane.b32.xlu0 %v1429, 124
        %v1433 = vpop.permute.xlu0 %1432
        %v1436 = vadd.f32 %v1415, %v1431
        %v1437 = vadd.f32 %v1416, %v1433
        %s1438 = sld [smem:[#allocation2 + $0x51]]
        %v1439 = vstv %s1438
        %v1440 = vmul.f32 %v200, %v1439
        %v1441 = vmul.f32 %v207, %v1439
        %v1442 = vmul.f32 %v214, %v1439
        %v1446 = vrot.slane %v1440, 4
        %v1447 = vrot.slane %v1441, 4
        %v1448 = vsel %vm1264, %v1446, %v1447
        %v1449 = vrot.slane %v1442, 4
        %v1450 = vsel %vm1264, %v1447, %v1449
        %1451 = vrot.lane.b32.xlu0 %v1448, 124
        %v1452 = vpop.permute.xlu0 %1451
        %1453 = vrot.lane.b32.xlu0 %v1450, 124
        %v1454 = vpop.permute.xlu0 %1453
        %v1457 = vadd.f32 %v1436, %v1452
        %v1458 = vadd.f32 %v1437, %v1454
        %s1459 = sld [smem:[#allocation2 + $0x21]]
        %v1460 = vstv %s1459
        %v1461 = vmul.f32 %v191, %v1460
        %v1462 = vmul.f32 %v192, %v1460
        %v1463 = vmul.f32 %v193, %v1460
        %v1467 = vrot.slane %v1461, 4
        %v1468 = vrot.slane %v1462, 4
        %v1469 = vsel %vm1264, %v1467, %v1468
        %v1470 = vrot.slane %v1463, 4
        %v1471 = vsel %vm1264, %v1468, %v1470
        %1472 = vrot.lane.b32.xlu0 %v1469, 123
        %v1473 = vpop.permute.xlu0 %1472
        %1474 = vrot.lane.b32.xlu0 %v1471, 123
        %v1475 = vpop.permute.xlu0 %1474
        %v1478 = vadd.f32 %v1457, %v1473
        %v1479 = vadd.f32 %v1458, %v1475
        %s1480 = sld [smem:[#allocation2 + $0x52]]
        %v1481 = vstv %s1480
        %v1482 = vmul.f32 %v200, %v1481
        %v1483 = vmul.f32 %v207, %v1481
        %v1484 = vmul.f32 %v214, %v1481
        %v1488 = vrot.slane %v1482, 4
        %v1489 = vrot.slane %v1483, 4
        %v1490 = vsel %vm1264, %v1488, %v1489
        %v1491 = vrot.slane %v1484, 4
        %v1492 = vsel %vm1264, %v1489, %v1491
        %1493 = vrot.lane.b32.xlu0 %v1490, 123
        %v1494 = vpop.permute.xlu0 %1493
        %1495 = vrot.lane.b32.xlu0 %v1492, 123
        %v1496 = vpop.permute.xlu0 %1495
        %v1499 = vadd.f32 %v1478, %v1494
        %v1500 = vadd.f32 %v1479, %v1496
        %s1501 = sld [smem:[#allocation2 + $0x22]]
        %v1502 = vstv %s1501
        %v1503 = vmul.f32 %v191, %v1502
        %v1504 = vmul.f32 %v192, %v1502
        %v1505 = vmul.f32 %v193, %v1502
        %v1509 = vrot.slane %v1503, 4
        %v1510 = vrot.slane %v1504, 4
        %v1511 = vsel %vm1264, %v1509, %v1510
        %v1512 = vrot.slane %v1505, 4
        %v1513 = vsel %vm1264, %v1510, %v1512
        %1514 = vrot.lane.b32.xlu0 %v1511, 122
        %v1515 = vpop.permute.xlu0 %1514
        %1516 = vrot.lane.b32.xlu0 %v1513, 122
        %v1517 = vpop.permute.xlu0 %1516
        %v1520 = vadd.f32 %v1499, %v1515
        %v1521 = vadd.f32 %v1500, %v1517
        %s1522 = sld [smem:[#allocation2 + $0x53]]
        %v1523 = vstv %s1522
        %v1524 = vmul.f32 %v200, %v1523
        %v1525 = vmul.f32 %v207, %v1523
        %v1526 = vmul.f32 %v214, %v1523
        %v1530 = vrot.slane %v1524, 4
        %v1531 = vrot.slane %v1525, 4
        %v1532 = vsel %vm1264, %v1530, %v1531
        %v1533 = vrot.slane %v1526, 4
        %v1534 = vsel %vm1264, %v1531, %v1533
        %1535 = vrot.lane.b32.xlu0 %v1532, 122
        %v1536 = vpop.permute.xlu0 %1535
        %1537 = vrot.lane.b32.xlu0 %v1534, 122
        %v1538 = vpop.permute.xlu0 %1537
        %v1541 = vadd.f32 %v1520, %v1536
        %v1542 = vadd.f32 %v1521, %v1538
        %s1543 = sld [smem:[#allocation2 + $0x23]]
        %v1544 = vstv %s1543
        %v1545 = vmul.f32 %v191, %v1544
        %v1546 = vmul.f32 %v192, %v1544
        %v1547 = vmul.f32 %v193, %v1544
        %vm1551 = vcmask 1042432
        %v1552 = vrot.slane %v1545, 5
        %v1553 = vrot.slane %v1546, 5
        %v1554 = vsel %vm1551, %v1552, %v1553
        %v1555 = vrot.slane %v1547, 5
        %v1556 = vsel %vm1551, %v1553, %v1555
        %v1559 = vadd.f32 %v1541, %v1554
        %v1560 = vadd.f32 %v1542, %v1556
        %s1561 = sld [smem:[#allocation2 + $0x54]]
        %v1562 = vstv %s1561
        %v1563 = vmul.f32 %v200, %v1562
        %v1564 = vmul.f32 %v207, %v1562
        %v1565 = vmul.f32 %v214, %v1562
        %v1569 = vrot.slane %v1563, 5
        %v1570 = vrot.slane %v1564, 5
        %v1571 = vsel %vm1551, %v1569, %v1570
        %v1572 = vrot.slane %v1565, 5
        %v1573 = vsel %vm1551, %v1570, %v1572
        %v1576 = vadd.f32 %v1559, %v1571
        %v1577 = vadd.f32 %v1560, %v1573
        %s1578 = sld [smem:[#allocation2 + $0x24]]
        %v1579 = vstv %s1578
        %v1580 = vmul.f32 %v191, %v1579
        %v1581 = vmul.f32 %v192, %v1579
        %v1582 = vmul.f32 %v193, %v1579
        %v1586 = vrot.slane %v1580, 5
        %v1587 = vrot.slane %v1581, 5
        %v1588 = vsel %vm1551, %v1586, %v1587
        %v1589 = vrot.slane %v1582, 5
        %v1590 = vsel %vm1551, %v1587, %v1589
        %1591 = vrot.lane.b32.xlu0 %v1588, 127
        %v1592 = vpop.permute.xlu0 %1591
        %1593 = vrot.lane.b32.xlu0 %v1590, 127
        %v1594 = vpop.permute.xlu0 %1593
        %v1597 = vadd.f32 %v1576, %v1592
        %v1598 = vadd.f32 %v1577, %v1594
        %s1599 = sld [smem:[#allocation2 + $0x55]]
        %v1600 = vstv %s1599
        %v1601 = vmul.f32 %v200, %v1600
        %v1602 = vmul.f32 %v207, %v1600
        %v1603 = vmul.f32 %v214, %v1600
        %v1607 = vrot.slane %v1601, 5
        %v1608 = vrot.slane %v1602, 5
        %v1609 = vsel %vm1551, %v1607, %v1608
        %v1610 = vrot.slane %v1603, 5
        %v1611 = vsel %vm1551, %v1608, %v1610
        %1612 = vrot.lane.b32.xlu0 %v1609, 127
        %v1613 = vpop.permute.xlu0 %1612
        %1614 = vrot.lane.b32.xlu0 %v1611, 127
        %v1615 = vpop.permute.xlu0 %1614
        %v1618 = vadd.f32 %v1597, %v1613
        %v1619 = vadd.f32 %v1598, %v1615
        %s1620 = sld [smem:[#allocation2 + $0x25]]
        %v1621 = vstv %s1620
        %v1622 = vmul.f32 %v191, %v1621
        %v1623 = vmul.f32 %v192, %v1621
        %v1624 = vmul.f32 %v193, %v1621
        %v1628 = vrot.slane %v1622, 5
        %v1629 = vrot.slane %v1623, 5
        %v1630 = vsel %vm1551, %v1628, %v1629
        %v1631 = vrot.slane %v1624, 5
        %v1632 = vsel %vm1551, %v1629, %v1631
        %1633 = vrot.lane.b32.xlu0 %v1630, 126
        %v1634 = vpop.permute.xlu0 %1633
        %1635 = vrot.lane.b32.xlu0 %v1632, 126
        %v1636 = vpop.permute.xlu0 %1635
        %v1639 = vadd.f32 %v1618, %v1634
        %v1640 = vadd.f32 %v1619, %v1636
        %s1641 = sld [smem:[#allocation2 + $0x56]]
        %v1642 = vstv %s1641
        %v1643 = vmul.f32 %v200, %v1642
        %v1644 = vmul.f32 %v207, %v1642
        %v1645 = vmul.f32 %v214, %v1642
        %v1649 = vrot.slane %v1643, 5
        %v1650 = vrot.slane %v1644, 5
        %v1651 = vsel %vm1551, %v1649, %v1650
        %v1652 = vrot.slane %v1645, 5
        %v1653 = vsel %vm1551, %v1650, %v1652
        %1654 = vrot.lane.b32.xlu0 %v1651, 126
        %v1655 = vpop.permute.xlu0 %1654
        %1656 = vrot.lane.b32.xlu0 %v1653, 126
        %v1657 = vpop.permute.xlu0 %1656
        %v1660 = vadd.f32 %v1639, %v1655
        %v1661 = vadd.f32 %v1640, %v1657
        %s1662 = sld [smem:[#allocation2 + $0x26]]
        %v1663 = vstv %s1662
        %v1664 = vmul.f32 %v191, %v1663
        %v1665 = vmul.f32 %v192, %v1663
        %v1666 = vmul.f32 %v193, %v1663
        %v1670 = vrot.slane %v1664, 5
        %v1671 = vrot.slane %v1665, 5
        %v1672 = vsel %vm1551, %v1670, %v1671
        %v1673 = vrot.slane %v1666, 5
        %v1674 = vsel %vm1551, %v1671, %v1673
        %1675 = vrot.lane.b32.xlu0 %v1672, 125
        %v1676 = vpop.permute.xlu0 %1675
        %1677 = vrot.lane.b32.xlu0 %v1674, 125
        %v1678 = vpop.permute.xlu0 %1677
        %v1681 = vadd.f32 %v1660, %v1676
        %v1682 = vadd.f32 %v1661, %v1678
        %s1683 = sld [smem:[#allocation2 + $0x57]]
        %v1684 = vstv %s1683
        %v1685 = vmul.f32 %v200, %v1684
        %v1686 = vmul.f32 %v207, %v1684
        %v1687 = vmul.f32 %v214, %v1684
        %v1691 = vrot.slane %v1685, 5
        %v1692 = vrot.slane %v1686, 5
        %v1693 = vsel %vm1551, %v1691, %v1692
        %v1694 = vrot.slane %v1687, 5
        %v1695 = vsel %vm1551, %v1692, %v1694
        %1696 = vrot.lane.b32.xlu0 %v1693, 125
        %v1697 = vpop.permute.xlu0 %1696
        %1698 = vrot.lane.b32.xlu0 %v1695, 125
        %v1699 = vpop.permute.xlu0 %1698
        %v1702 = vadd.f32 %v1681, %v1697
        %v1703 = vadd.f32 %v1682, %v1699
        %s1704 = sld [smem:[#allocation2 + $0x27]]
        %v1705 = vstv %s1704
        %v1706 = vmul.f32 %v191, %v1705
        %v1707 = vmul.f32 %v192, %v1705
        %v1708 = vmul.f32 %v193, %v1705
        %v1712 = vrot.slane %v1706, 5
        %v1713 = vrot.slane %v1707, 5
        %v1714 = vsel %vm1551, %v1712, %v1713
        %v1715 = vrot.slane %v1708, 5
        %v1716 = vsel %vm1551, %v1713, %v1715
        %1717 = vrot.lane.b32.xlu0 %v1714, 124
        %v1718 = vpop.permute.xlu0 %1717
        %1719 = vrot.lane.b32.xlu0 %v1716, 124
        %v1720 = vpop.permute.xlu0 %1719
        %v1723 = vadd.f32 %v1702, %v1718
        %v1724 = vadd.f32 %v1703, %v1720
        %s1725 = sld [smem:[#allocation2 + $0x58]]
        %v1726 = vstv %s1725
        %v1727 = vmul.f32 %v200, %v1726
        %v1728 = vmul.f32 %v207, %v1726
        %v1729 = vmul.f32 %v214, %v1726
        %v1733 = vrot.slane %v1727, 5
        %v1734 = vrot.slane %v1728, 5
        %v1735 = vsel %vm1551, %v1733, %v1734
        %v1736 = vrot.slane %v1729, 5
        %v1737 = vsel %vm1551, %v1734, %v1736
        %1738 = vrot.lane.b32.xlu0 %v1735, 124
        %v1739 = vpop.permute.xlu0 %1738
        %1740 = vrot.lane.b32.xlu0 %v1737, 124
        %v1741 = vpop.permute.xlu0 %1740
        %v1744 = vadd.f32 %v1723, %v1739
        %v1745 = vadd.f32 %v1724, %v1741
        %s1746 = sld [smem:[#allocation2 + $0x28]]
        %v1747 = vstv %s1746
        %v1748 = vmul.f32 %v191, %v1747
        %v1749 = vmul.f32 %v192, %v1747
        %v1750 = vmul.f32 %v193, %v1747
        %v1754 = vrot.slane %v1748, 5
        %v1755 = vrot.slane %v1749, 5
        %v1756 = vsel %vm1551, %v1754, %v1755
        %v1757 = vrot.slane %v1750, 5
        %v1758 = vsel %vm1551, %v1755, %v1757
        %1759 = vrot.lane.b32.xlu0 %v1756, 123
        %v1760 = vpop.permute.xlu0 %1759
        %1761 = vrot.lane.b32.xlu0 %v1758, 123
        %v1762 = vpop.permute.xlu0 %1761
        %v1765 = vadd.f32 %v1744, %v1760
        %v1766 = vadd.f32 %v1745, %v1762
        %s1767 = sld [smem:[#allocation2 + $0x59]]
        %v1768 = vstv %s1767
        %v1769 = vmul.f32 %v200, %v1768
        %v1770 = vmul.f32 %v207, %v1768
        %v1771 = vmul.f32 %v214, %v1768
        %v1775 = vrot.slane %v1769, 5
        %v1776 = vrot.slane %v1770, 5
        %v1777 = vsel %vm1551, %v1775, %v1776
        %v1778 = vrot.slane %v1771, 5
        %v1779 = vsel %vm1551, %v1776, %v1778
        %1780 = vrot.lane.b32.xlu0 %v1777, 123
        %v1781 = vpop.permute.xlu0 %1780
        %1782 = vrot.lane.b32.xlu0 %v1779, 123
        %v1783 = vpop.permute.xlu0 %1782
        %v1786 = vadd.f32 %v1765, %v1781
        %v1787 = vadd.f32 %v1766, %v1783
        %s1788 = sld [smem:[#allocation2 + $0x29]]
        %v1789 = vstv %s1788
        %v1790 = vmul.f32 %v191, %v1789
        %v1791 = vmul.f32 %v192, %v1789
        %v1792 = vmul.f32 %v193, %v1789
        %v1796 = vrot.slane %v1790, 5
        %v1797 = vrot.slane %v1791, 5
        %v1798 = vsel %vm1551, %v1796, %v1797
        %v1799 = vrot.slane %v1792, 5
        %v1800 = vsel %vm1551, %v1797, %v1799
        %1801 = vrot.lane.b32.xlu0 %v1798, 122
        %v1802 = vpop.permute.xlu0 %1801
        %1803 = vrot.lane.b32.xlu0 %v1800, 122
        %v1804 = vpop.permute.xlu0 %1803
        %v1807 = vadd.f32 %v1786, %v1802
        %v1808 = vadd.f32 %v1787, %v1804
        %s1809 = sld [smem:[#allocation2 + $0x5a]]
        %v1810 = vstv %s1809
        %v1811 = vmul.f32 %v200, %v1810
        %v1812 = vmul.f32 %v207, %v1810
        %v1813 = vmul.f32 %v214, %v1810
        %v1817 = vrot.slane %v1811, 5
        %v1818 = vrot.slane %v1812, 5
        %v1819 = vsel %vm1551, %v1817, %v1818
        %v1820 = vrot.slane %v1813, 5
        %v1821 = vsel %vm1551, %v1818, %v1820
        %1822 = vrot.lane.b32.xlu0 %v1819, 122
        %v1823 = vpop.permute.xlu0 %1822
        %1824 = vrot.lane.b32.xlu0 %v1821, 122
        %v1825 = vpop.permute.xlu0 %1824
        %v1828 = vadd.f32 %v1807, %v1823
        %v1829 = vadd.f32 %v1808, %v1825
        %s1830 = sld [smem:[#allocation2 + $0x2a]]
        %v1831 = vstv %s1830
        %v1832 = vmul.f32 %v191, %v1831
        %v1833 = vmul.f32 %v192, %v1831
        %v1834 = vmul.f32 %v193, %v1831
        %vm1838 = vcmask 1041408
        %v1839 = vrot.slane %v1832, 6
        %v1840 = vrot.slane %v1833, 6
        %v1841 = vsel %vm1838, %v1839, %v1840
        %v1842 = vrot.slane %v1834, 6
        %v1843 = vsel %vm1838, %v1840, %v1842
        %v1846 = vadd.f32 %v1828, %v1841
        %v1847 = vadd.f32 %v1829, %v1843
        %s1848 = sld [smem:[#allocation2 + $0x5b]]
        %v1849 = vstv %s1848
        %v1850 = vmul.f32 %v200, %v1849
        %v1851 = vmul.f32 %v207, %v1849
        %v1852 = vmul.f32 %v214, %v1849
        %v1856 = vrot.slane %v1850, 6
        %v1857 = vrot.slane %v1851, 6
        %v1858 = vsel %vm1838, %v1856, %v1857
        %v1859 = vrot.slane %v1852, 6
        %v1860 = vsel %vm1838, %v1857, %v1859
        %v1863 = vadd.f32 %v1846, %v1858
        %v1864 = vadd.f32 %v1847, %v1860
        %s1865 = sld [smem:[#allocation2 + $0x2b]]
        %v1866 = vstv %s1865
        %v1867 = vmul.f32 %v191, %v1866
        %v1868 = vmul.f32 %v192, %v1866
        %v1869 = vmul.f32 %v193, %v1866
        %v1873 = vrot.slane %v1867, 6
        %v1874 = vrot.slane %v1868, 6
        %v1875 = vsel %vm1838, %v1873, %v1874
        %v1876 = vrot.slane %v1869, 6
        %v1877 = vsel %vm1838, %v1874, %v1876
        %1878 = vrot.lane.b32.xlu0 %v1875, 127
        %v1879 = vpop.permute.xlu0 %1878
        %1880 = vrot.lane.b32.xlu0 %v1877, 127
        %v1881 = vpop.permute.xlu0 %1880
        %v1884 = vadd.f32 %v1863, %v1879
        %v1885 = vadd.f32 %v1864, %v1881
        %s1886 = sld [smem:[#allocation2 + $0x5c]]
        %v1887 = vstv %s1886
        %v1888 = vmul.f32 %v200, %v1887
        %v1889 = vmul.f32 %v207, %v1887
        %v1890 = vmul.f32 %v214, %v1887
        %v1894 = vrot.slane %v1888, 6
        %v1895 = vrot.slane %v1889, 6
        %v1896 = vsel %vm1838, %v1894, %v1895
        %v1897 = vrot.slane %v1890, 6
        %v1898 = vsel %vm1838, %v1895, %v1897
        %1899 = vrot.lane.b32.xlu0 %v1896, 127
        %v1900 = vpop.permute.xlu0 %1899
        %1901 = vrot.lane.b32.xlu0 %v1898, 127
        %v1902 = vpop.permute.xlu0 %1901
        %v1905 = vadd.f32 %v1884, %v1900
        %v1906 = vadd.f32 %v1885, %v1902
        %s1907 = sld [smem:[#allocation2 + $0x2c]]
        %v1908 = vstv %s1907
        %v1909 = vmul.f32 %v191, %v1908
        %v1910 = vmul.f32 %v192, %v1908
        %v1911 = vmul.f32 %v193, %v1908
        %v1915 = vrot.slane %v1909, 6
        %v1916 = vrot.slane %v1910, 6
        %v1917 = vsel %vm1838, %v1915, %v1916
        %v1918 = vrot.slane %v1911, 6
        %v1919 = vsel %vm1838, %v1916, %v1918
        %1920 = vrot.lane.b32.xlu0 %v1917, 126
        %v1921 = vpop.permute.xlu0 %1920
        %1922 = vrot.lane.b32.xlu0 %v1919, 126
        %v1923 = vpop.permute.xlu0 %1922
        %v1926 = vadd.f32 %v1905, %v1921
        %v1927 = vadd.f32 %v1906, %v1923
        %s1928 = sld [smem:[#allocation2 + $0x5d]]
        %v1929 = vstv %s1928
        %v1930 = vmul.f32 %v200, %v1929
        %v1931 = vmul.f32 %v207, %v1929
        %v1932 = vmul.f32 %v214, %v1929
        %v1936 = vrot.slane %v1930, 6
        %v1937 = vrot.slane %v1931, 6
        %v1938 = vsel %vm1838, %v1936, %v1937
        %v1939 = vrot.slane %v1932, 6
        %v1940 = vsel %vm1838, %v1937, %v1939
        %1941 = vrot.lane.b32.xlu0 %v1938, 126
        %v1942 = vpop.permute.xlu0 %1941
        %1943 = vrot.lane.b32.xlu0 %v1940, 126
        %v1944 = vpop.permute.xlu0 %1943
        %v1947 = vadd.f32 %v1926, %v1942
        %v1948 = vadd.f32 %v1927, %v1944
        %s1949 = sld [smem:[#allocation2 + $0x2d]]
        %v1950 = vstv %s1949
        %v1951 = vmul.f32 %v191, %v1950
        %v1952 = vmul.f32 %v192, %v1950
        %v1953 = vmul.f32 %v193, %v1950
        %v1957 = vrot.slane %v1951, 6
        %v1958 = vrot.slane %v1952, 6
        %v1959 = vsel %vm1838, %v1957, %v1958
        %v1960 = vrot.slane %v1953, 6
        %v1961 = vsel %vm1838, %v1958, %v1960
        %1962 = vrot.lane.b32.xlu0 %v1959, 125
        %v1963 = vpop.permute.xlu0 %1962
        %1964 = vrot.lane.b32.xlu0 %v1961, 125
        %v1965 = vpop.permute.xlu0 %1964
        %v1968 = vadd.f32 %v1947, %v1963
        %v1969 = vadd.f32 %v1948, %v1965
        %s1970 = sld [smem:[#allocation2 + $0x5e]]
        %v1971 = vstv %s1970
        %v1972 = vmul.f32 %v200, %v1971
        %v1973 = vmul.f32 %v207, %v1971
        %v1974 = vmul.f32 %v214, %v1971
        %v1978 = vrot.slane %v1972, 6
        %v1979 = vrot.slane %v1973, 6
        %v1980 = vsel %vm1838, %v1978, %v1979
        %v1981 = vrot.slane %v1974, 6
        %v1982 = vsel %vm1838, %v1979, %v1981
        %1983 = vrot.lane.b32.xlu0 %v1980, 125
        %v1984 = vpop.permute.xlu0 %1983
        %1985 = vrot.lane.b32.xlu0 %v1982, 125
        %v1986 = vpop.permute.xlu0 %1985
        %v1989 = vadd.f32 %v1968, %v1984
        %v1990 = vadd.f32 %v1969, %v1986
        %s1991 = sld [smem:[#allocation2 + $0x2e]]
        %v1992 = vstv %s1991
        %v1993 = vmul.f32 %v191, %v1992
        %v1994 = vmul.f32 %v192, %v1992
        %v1995 = vmul.f32 %v193, %v1992
        %v1999 = vrot.slane %v1993, 6
        %v2000 = vrot.slane %v1994, 6
        %v2001 = vsel %vm1838, %v1999, %v2000
        %v2002 = vrot.slane %v1995, 6
        %v2003 = vsel %vm1838, %v2000, %v2002
        %2004 = vrot.lane.b32.xlu0 %v2001, 124
        %v2005 = vpop.permute.xlu0 %2004
        %2006 = vrot.lane.b32.xlu0 %v2003, 124
        %v2007 = vpop.permute.xlu0 %2006
        %v2010 = vadd.f32 %v1989, %v2005
        %v2011 = vadd.f32 %v1990, %v2007
        %s2012 = sld [smem:[#allocation2 + $0x5f]]
        %v2013 = vstv %s2012
        %v2014 = vmul.f32 %v200, %v2013
        %v2015 = vmul.f32 %v207, %v2013
        %v2016 = vmul.f32 %v214, %v2013
        %v2020 = vrot.slane %v2014, 6
        %v2021 = vrot.slane %v2015, 6
        %v2022 = vsel %vm1838, %v2020, %v2021
        %v2023 = vrot.slane %v2016, 6
        %v2024 = vsel %vm1838, %v2021, %v2023
        %2025 = vrot.lane.b32.xlu0 %v2022, 124
        %v2026 = vpop.permute.xlu0 %2025
        %2027 = vrot.lane.b32.xlu0 %v2024, 124
        %v2028 = vpop.permute.xlu0 %2027
        %v2031 = vadd.f32 %v2010, %v2026
        %v2032 = vadd.f32 %v2011, %v2028
        %s2033 = sld [smem:[#allocation2 + $0x2f]]
        %v2034 = vstv %s2033
        %v2035 = vmul.f32 %v191, %v2034
        %v2036 = vmul.f32 %v192, %v2034
        %v2037 = vmul.f32 %v193, %v2034
        %v2041 = vrot.slane %v2035, 6
        %v2042 = vrot.slane %v2036, 6
        %v2043 = vsel %vm1838, %v2041, %v2042
        %v2044 = vrot.slane %v2037, 6
        %v2045 = vsel %vm1838, %v2042, %v2044
        %2046 = vrot.lane.b32.xlu0 %v2043, 123
        %v2047 = vpop.permute.xlu0 %2046
        %2048 = vrot.lane.b32.xlu0 %v2045, 123
        %v2049 = vpop.permute.xlu0 %2048
        %v2052 = vadd.f32 %v2031, %v2047
        %v2053 = vadd.f32 %v2032, %v2049
        %s2054 = sld [smem:[#allocation2 + $0x60]]
        %v2055 = vstv %s2054
        %v2056 = vmul.f32 %v200, %v2055
        %v2057 = vmul.f32 %v207, %v2055
        %v2058 = vmul.f32 %v214, %v2055
        %v2062 = vrot.slane %v2056, 6
        %v2063 = vrot.slane %v2057, 6
        %v2064 = vsel %vm1838, %v2062, %v2063
        %v2065 = vrot.slane %v2058, 6
        %v2066 = vsel %vm1838, %v2063, %v2065
        %2067 = vrot.lane.b32.xlu0 %v2064, 123
        %v2068 = vpop.permute.xlu0 %2067
        %2069 = vrot.lane.b32.xlu0 %v2066, 123
        %v2070 = vpop.permute.xlu0 %2069
        %v2073 = vadd.f32 %v2052, %v2068
        %v2074 = vadd.f32 %v2053, %v2070
        %s2075 = sld [smem:[#allocation2 + $0x30]]
        %v2076 = vstv %s2075
        %v2077 = vmul.f32 %v191, %v2076
        %v2078 = vmul.f32 %v192, %v2076
        %v2079 = vmul.f32 %v193, %v2076
        %v2083 = vrot.slane %v2077, 6
        %v2084 = vrot.slane %v2078, 6
        %v2085 = vsel %vm1838, %v2083, %v2084
        %v2086 = vrot.slane %v2079, 6
        %v2087 = vsel %vm1838, %v2084, %v2086
        %2088 = vrot.lane.b32.xlu0 %v2085, 122
        %v2089 = vpop.permute.xlu0 %2088
        %2090 = vrot.lane.b32.xlu0 %v2087, 122
        %v2091 = vpop.permute.xlu0 %2090
        %v2094 = vadd.f32 %v2073, %v2089
        %v2095 = vadd.f32 %v2074, %v2091
        %s2096 = sld [smem:[#allocation2 + $0x61]]
        %v2097 = vstv %s2096
        %v2098 = vmul.f32 %v200, %v2097
        %v2099 = vmul.f32 %v207, %v2097
        %v2100 = vmul.f32 %v214, %v2097
        %v2104 = vrot.slane %v2098, 6
        %v2105 = vrot.slane %v2099, 6
        %v2106 = vsel %vm1838, %v2104, %v2105
        %v2107 = vrot.slane %v2100, 6
        %v2108 = vsel %vm1838, %v2105, %v2107
        %2109 = vrot.lane.b32.xlu0 %v2106, 122
        %v2110 = vpop.permute.xlu0 %2109
        %2111 = vrot.lane.b32.xlu0 %v2108, 122
        %v2112 = vpop.permute.xlu0 %2111
        %v2115 = vadd.f32 %v2094, %v2110
        %v2116 = vadd.f32 %v2095, %v2112
        %v2117 = vsub.f32 0.0, %v2115
        %v2118 = vsub.f32 0.0, %v2116
        %v2119 = vmul.f32 %v2117, 1.442695
        %v2120 = vpow.pop %v2119
        %v2121 = vmul.f32 %v2118, 1.442695
        %v2122 = vpow.pop %v2121
        %v2123 = vadd.f32 %v2120, 1.0
        %v2124 = vadd.f32 %v2122, 1.0
        %v2125 = vrcp.pop %v2123
        %v2126 = vmul.f32 1.0, %v2125
        %v2127 = vrcp.pop %v2124
        %v2128 = vmul.f32 1.0, %v2127
        %vm2129 = vcmask 130048
        %2130 = vst.msk [vmem:[%s150] sm:$0xff] %vm2129, %v2126
        %2131 = vst.msk [vmem:[%s150 + $0x8] sm:$0xff] %vm2129, %v2128
        %s2132 = sand.u32 %s72, 1
        %s2133 = scalar_lea.sflag [#allocation3], %s2132
        %s2134 = sand.u32 %s72, 1
        %s2135 = smul.addr %s2134, 16
        %s2136 = scalar_lea.vmem [#allocation5], %s2135
        // Predicated region
        $region33: #{tpu_custom_call.1} parent=27 // pred_check
          %p2137 = pneg %p82
        $region34: #{tpu_custom_call.1} parent=27 // pred_check_branch
          %2139 = sbr.rel (%p2137) target = $region36
        $region35: #{tpu_custom_call.1} parent=27 // pred_region
          %s2141 = ssub.s32 256, 256
          %2142 = vsyncadd %s2133, %s2141
          %s2143 = smul.addr %s17, 2
          %s2144 = smul.addr %s2143, 128
          %s2145 = scalar_lea.hbm %s2, %s2144
          %s2146 = sshll.u32 %s2136, 4
          %s2147 = int_to_ptr.vmem [resolvable:$true] %s2146
          %2152 = dma.vmem_to_hbm [thread:$0]  %s2147, 256, %s2145, %s2133, 128, 128, 8
        $region36: #{tpu_custom_call.1} parent=27 // pred_fallthru
          _
      $region28: #{tpu_custom_call.1} parent=5 // pred_fallthru
        _
      %p2153 = scmp.le.s32.totalorder 2, %s12
      // Predicated region
      $region37: #{tpu_custom_call.1} parent=5 // pred_check
        %p2154 = pneg %p2153
      $region38: #{tpu_custom_call.1} parent=5 // pred_check_branch
        %2156 = sbr.rel (%p2154) target = $region40
      $region39: #{tpu_custom_call.1} parent=5 // pred_region
        %s2157 = ssub.s32 %s12, 2
        // Predicated region
        $region41: #{tpu_custom_call.1} parent=39 // pred_check
          %p2158 = pneg %p88
        $region42: #{tpu_custom_call.1} parent=39 // pred_check_branch
          %2160 = sbr.rel (%p2158) target = $region44
        $region43: #{tpu_custom_call.1} parent=39 // pred_region
          %s2161 = sand.u32 %s73, 1
          %s2162 = scalar_lea.sflag [#allocation3], %s2161
          %s2163 = sand.u32 %s73, 1
          %s2164 = smul.addr %s2163, 16
          %s2165 = scalar_lea.vmem [#allocation5], %s2164
          %2166 = dma.done %s2162, 256
        $region44: #{tpu_custom_call.1} parent=39 // pred_fallthru
          _
      $region40: #{tpu_custom_call.1} parent=5 // pred_fallthru
        _
    $region6: #{tpu_custom_call.1} parent=1 // loop_footer
      %s16 = sadd.s32 1, %s12
    $region7: #{tpu_custom_call.1} parent=1 // loop_footer_branch
      %11 = sbr.rel target = $region3
    $region8: #{tpu_custom_call.1} parent=1 // loop_exit
      _
    %2167 = vsyncpa [#allocation3], 1
    %s2168 = scalar_lea.sflag [#allocation3], 1
    %2169 = vsyncpa %s2168, 1
    %2170 = vsyncpa [#allocation4], 1
    %s2171 = scalar_lea.sflag [#allocation4], 1
    %2172 = vsyncpa %s2171, 1

</llo_original>
